<compile_context>
chip_gen: v6e
topology: v6e:2x2x1
jax: 0.10.0
libtpu: 0.0.40
codegen_flags: <defaults>
</compile_context>

<pallas_src>
import jax
import jax.numpy as jnp
from jax import lax
from jax.experimental import pallas as pl
from jax.experimental.pallas import tpu as pltpu


def style_pool_kernel(tok_ref, m_ref, emb_ref, w_ref, b_ref, out_ref):
    """Processes TB batch rows per grid step.

    tok_ref: (TB, S)  int32 token ids           (S on the lane axis)
    m_ref:   (TB, S)  f32   attention mask      (S on the lane axis)
    emb_ref: (V, H)   bf16  embedding table     (whole table, VMEM resident)
    w_ref:   (H, H)   f32   encoder projection weight
    b_ref:   (1, H)   f32   encoder projection bias
    out_ref: (TB, H)  f32   pooled style embeddings (lane-dense)
    """
    tok = tok_ref[...]                                   # (TB, S) int32
    m = m_ref[...]                                       # (TB, S) f32
    tb, s_len = tok.shape
    v_size = emb_ref.shape[0]

    # Masked one-hot counts: counts[t, v] = sum_s m[t, s] * (tok[t, s] == v).
    # Small (TB, S, V) f32 temporary in VMEM; mask folded in so the (TB, S, H)
    # token-feature tensor never exists anywhere.
    vocab_ids = lax.broadcasted_iota(jnp.int32, (tb, s_len, v_size), 2)
    masked_oh = jnp.where(tok[:, :, None] == vocab_ids, m[:, :, None], 0.0)
    counts = jnp.sum(masked_oh, axis=1)                  # (TB, V) f32, integers <= S

    # Embedding contraction on the MXU.  counts <= S are exact in bf16, the
    # table is already bf16, accumulation is f32 -> matches the reference's
    # f32 masked sum up to summation order.
    num = jnp.dot(counts.astype(jnp.bfloat16), emb_ref[...],
                  preferred_element_type=jnp.float32)    # (TB, H) f32

    # Denominator + clamp stay in f32 to match torch.clamp(min=1e-9).
    den = jnp.sum(m, axis=1, keepdims=True)              # (TB, 1)
    pooled = num / jnp.maximum(den, 1e-9)                # (TB, H)

    # Pool-then-project is exact by linearity; bias contributes 1x for any real
    # row and 0x for an all-padding row (the per-token reference zeroes it too).
    bias_scale = jnp.where(den > 0.0, 1.0, 0.0)          # (TB, 1), exact 1/0

    out_ref[...] = (
        jnp.dot(pooled, w_ref[...], preferred_element_type=jnp.float32)
        + b_ref[...] * bias_scale
    )


def style_encoder_forward(token_ids, attn_mask, emb_table, w, b, *, tb=16):
    """token_ids/attn_mask: (B, S); emb_table: (V, H) bf16; w: (H, H); b: (1, H)."""
    B, S = token_ids.shape
    V, H = emb_table.shape

    tb = min(tb, B)
    # Pad B to a multiple of tb; padded rows have mask 0 -> output 0, then slice.
    b_pad = pl.cdiv(B, tb) * tb
    if b_pad != B:
        token_ids = jnp.pad(token_ids, ((0, b_pad - B), (0, 0)))
        attn_mask = jnp.pad(attn_mask, ((0, b_pad - B), (0, 0)))

    mask = attn_mask.astype(jnp.float32)                 # (b_pad, S), S on lanes
    grid = (b_pad // tb,)

    out = pl.pallas_call(
        style_pool_kernel,
        out_shape=jax.ShapeDtypeStruct((b_pad, H), jnp.float32),
        grid=grid,
        in_specs=[
            pl.BlockSpec((tb, S), lambda i: (i, 0)),     # token ids
            pl.BlockSpec((tb, S), lambda i: (i, 0)),     # mask
            pl.BlockSpec((V, H), lambda i: (0, 0)),      # embedding table (whole)
            pl.BlockSpec((H, H), lambda i: (0, 0)),      # projection weight
            pl.BlockSpec((1, H), lambda i: (0, 0)),      # projection bias
        ],
        out_specs=pl.BlockSpec((tb, H), lambda i: (i, 0)),
        compiler_params=pltpu.CompilerParams(
            dimension_semantics=("parallel",)),
    )(token_ids, mask, emb_table, w, b)
    return out[:B]                                       # (B, H)


def reference_forward(token_ids, attn_mask, emb_table, w, b):
    # Mirrors the original module: per-token encoder output, then masked mean.
    x = emb_table[token_ids].astype(jnp.float32)                 # (B, S, H)
    h = jnp.einsum("bsh,hk->bsk", x, w) + b[0]
    m = attn_mask.astype(jnp.float32)[..., None]                 # (B, S, 1)
    return jnp.sum(h * m, axis=1) / jnp.maximum(jnp.sum(m, axis=1), 1e-9)


if __name__ == "__main__":
    # S matches the module's max_length=128; H, VOCAB lane-dense (multiples of 128).
    # B=64 / TB=16 -> grid of 4 "parallel" steps (2 per v7x TensorCore).
    B, S, H, VOCAB, TB = 64, 128, 128, 128, 16

    key = jax.random.PRNGKey(0)
    k_tok, k_len, k_emb, k_w, k_b = jax.random.split(key, 5)

    # Deterministic "tokenized" inputs (stand-in for the HF tokenizer output).
    token_ids = jax.random.randint(k_tok, (B, S), 0, VOCAB, dtype=jnp.int32)
    lengths = jax.random.randint(k_len, (B,), 1, S + 1, dtype=jnp.int32)
    lengths = lengths.at[0].set(S).at[3].set(0)    # include full & all-padding rows
    attn_mask = (jnp.arange(S)[None, :] < lengths[:, None]).astype(jnp.int32)

    # Deterministic synthetic encoder parameters (bf16 table, f32 projection).
    emb_table = (jax.random.normal(k_emb, (VOCAB, H), dtype=jnp.float32)
                 * 0.1).astype(jnp.bfloat16)
    w = jax.random.normal(k_w, (H, H), dtype=jnp.float32) * 0.1
    b = jax.random.normal(k_b, (1, H), dtype=jnp.float32) * 0.1

    out = style_encoder_forward(token_ids, attn_mask, emb_table, w, b, tb=TB)
    out = jax.block_until_ready(out)

    ref = reference_forward(token_ids, attn_mask, emb_table, w, b)
    assert out.shape == (B, H), out.shape
    max_err = float(jnp.max(jnp.abs(out - ref)))
    assert jnp.allclose(out, ref, atol=1e-4, rtol=1e-4), f"mismatch, max_err={max_err}"

    print("KERNEL_OK")
</pallas_src>

<mosaic_0001>
module attributes {stable_mosaic.version = 11 : i64} {
  func.func @style_pool_kernel(%arg0: i32, %arg1: memref<16x128xi32, #tpu.memory_space<vmem>>, %arg2: memref<16x128xf32, #tpu.memory_space<vmem>>, %arg3: memref<128x128xbf16, #tpu.memory_space<vmem>>, %arg4: memref<128x128xf32, #tpu.memory_space<vmem>>, %arg5: memref<1x128xf32, #tpu.memory_space<vmem>>, %arg6: memref<16x128xf32, #tpu.memory_space<vmem>>) attributes {dimension_semantics = [#tpu.dimension_semantics<parallel>], iteration_bounds = array<i64: 4>, scalar_prefetch = 0 : i64, scratch_operands = 0 : i64, tpu.core_type = #tpu.core_type<tc>, window_params = [{transform_indices = @transform_0, window_bounds = array<i64: 16, 128>}, {transform_indices = @transform_1, window_bounds = array<i64: 16, 128>}, {pipeline_mode = #tpu.pipeline_mode<synchronous>, transform_indices = @transform_2, window_bounds = array<i64: 128, 128>}, {pipeline_mode = #tpu.pipeline_mode<synchronous>, transform_indices = @transform_3, window_bounds = array<i64: 128, 128>}, {pipeline_mode = #tpu.pipeline_mode<synchronous>, transform_indices = @transform_4, window_bounds = array<i64: 1, 128>}, {transform_indices = @transform_5, window_bounds = array<i64: 16, 128>}]} {
    %c0 = arith.constant 0 : index
    %c0_0 = arith.constant 0 : index
    %0 = vector.load %arg1[%c0, %c0_0] : memref<16x128xi32, #tpu.memory_space<vmem>>, vector<16x128xi32>
    %c0_1 = arith.constant 0 : index
    %c0_2 = arith.constant 0 : index
    %1 = vector.load %arg2[%c0_1, %c0_2] : memref<16x128xf32, #tpu.memory_space<vmem>>, vector<16x128xf32>
    %2 = tpu.iota {dimensions = array<i32: 2>} : vector<16x128x128xi32>
    %3 = vector.shape_cast %0 : vector<16x128xi32> to vector<16x128x1xi32>
    %4 = vector.broadcast %3 : vector<16x128x1xi32> to vector<16x128x128xi32>
    %5 = arith.cmpi eq, %4, %2 : vector<16x128x128xi32>
    %6 = vector.shape_cast %1 : vector<16x128xf32> to vector<16x128x1xf32>
    %cst = arith.constant 0.000000e+00 : f32
    %7 = vector.shape_cast %6 : vector<16x128x1xf32> to vector<16x128x1xf32>
    %8 = vector.broadcast %7 : vector<16x128x1xf32> to vector<16x128x128xf32>
    %9 = vector.broadcast %cst : f32 to vector<16x128x128xf32>
    %10 = arith.select %5, %8, %9 : vector<16x128x128xi1>, vector<16x128x128xf32>
    %cst_3 = arith.constant dense<0.000000e+00> : vector<16x128xf32>
    %11 = vector.multi_reduction <add>, %10, %cst_3 [1] : vector<16x128x128xf32> to vector<16x128xf32>
    %12 = arith.truncf %11 : vector<16x128xf32> to vector<16x128xbf16>
    %c0_4 = arith.constant 0 : index
    %c0_5 = arith.constant 0 : index
    %13 = vector.load %arg3[%c0_4, %c0_5] : memref<128x128xbf16, #tpu.memory_space<vmem>>, vector<128x128xbf16>
    %cst_6 = arith.constant dense<0.000000e+00> : vector<16x128xf32>
    %14 = tpu.matmul %12, %13, %cst_6 {dimension_numbers = #tpu.dot_dimension_numbers<[1], [0], [0], [1], [0, 0, 1, 1], [], []>} : vector<16x128xbf16>, vector<128x128xbf16>, vector<16x128xf32> -> vector<16x128xf32>
    %cst_7 = arith.constant dense<0.000000e+00> : vector<16xf32>
    %15 = vector.multi_reduction <add>, %1, %cst_7 [1] : vector<16x128xf32> to vector<16xf32>
    %16 = vector.shape_cast %15 : vector<16xf32> to vector<16x1xf32>
    %cst_8 = arith.constant 9.99999971E-10 : f32
    %17 = vector.broadcast %cst_8 : f32 to vector<16x1xf32>
    %18 = arith.maximumf %16, %17 : vector<16x1xf32>
    %19 = vector.broadcast %18 : vector<16x1xf32> to vector<16x128xf32>
    %20 = arith.divf %14, %19 : vector<16x128xf32>
    %cst_9 = arith.constant 0.000000e+00 : f32
    %21 = vector.broadcast %cst_9 : f32 to vector<16x1xf32>
    %22 = arith.cmpf ogt, %16, %21 : vector<16x1xf32>
    %cst_10 = arith.constant 1.000000e+00 : f32
    %cst_11 = arith.constant 0.000000e+00 : f32
    %23 = vector.broadcast %cst_10 : f32 to vector<16x1xf32>
    %24 = vector.broadcast %cst_11 : f32 to vector<16x1xf32>
    %25 = arith.select %22, %23, %24 : vector<16x1xi1>, vector<16x1xf32>
    %c0_12 = arith.constant 0 : index
    %c0_13 = arith.constant 0 : index
    %26 = vector.load %arg4[%c0_12, %c0_13] : memref<128x128xf32, #tpu.memory_space<vmem>>, vector<128x128xf32>
    %cst_14 = arith.constant dense<0.000000e+00> : vector<16x128xf32>
    %27 = tpu.matmul %20, %26, %cst_14 {dimension_numbers = #tpu.dot_dimension_numbers<[1], [0], [0], [1], [0, 0, 1, 1], [], []>} : vector<16x128xf32>, vector<128x128xf32>, vector<16x128xf32> -> vector<16x128xf32>
    %c0_15 = arith.constant 0 : index
    %c0_16 = arith.constant 0 : index
    %28 = vector.load %arg5[%c0_15, %c0_16] : memref<1x128xf32, #tpu.memory_space<vmem>>, vector<1x128xf32>
    %29 = vector.broadcast %28 : vector<1x128xf32> to vector<16x128xf32>
    %30 = vector.broadcast %25 : vector<16x1xf32> to vector<16x128xf32>
    %31 = arith.mulf %29, %30 : vector<16x128xf32>
    %32 = arith.addf %27, %31 : vector<16x128xf32>
    %c0_17 = arith.constant 0 : index
    %c0_18 = arith.constant 0 : index
    %33 = vector.load %arg6[%c0_17, %c0_18] : memref<16x128xf32, #tpu.memory_space<vmem>>, vector<16x128xf32>
    tpu.vector_store %arg6[%c0_17, %c0_18], %32 {strides = array<i32>} : memref<16x128xf32, #tpu.memory_space<vmem>>, vector<16x128xf32>,
    return
  }
  func.func @transform_0(%arg0: i32) -> (i32, i32) {
    %c0_i32 = arith.constant 0 : i32
    %c0_i32_0 = arith.constant 0 : i32
    return %arg0, %c0_i32 : i32, i32
  }
  func.func @transform_1(%arg0: i32) -> (i32, i32) {
    %c0_i32 = arith.constant 0 : i32
    %c0_i32_0 = arith.constant 0 : i32
    return %arg0, %c0_i32 : i32, i32
  }
  func.func @transform_2(%arg0: i32) -> (i32, i32) {
    %c0_i32 = arith.constant 0 : i32
    %c0_i32_0 = arith.constant 0 : i32
    %c0_i32_1 = arith.constant 0 : i32
    return %c0_i32, %c0_i32_0 : i32, i32
  }
  func.func @transform_3(%arg0: i32) -> (i32, i32) {
    %c0_i32 = arith.constant 0 : i32
    %c0_i32_0 = arith.constant 0 : i32
    %c0_i32_1 = arith.constant 0 : i32
    return %c0_i32, %c0_i32_0 : i32, i32
  }
  func.func @transform_4(%arg0: i32) -> (i32, i32) {
    %c0_i32 = arith.constant 0 : i32
    %c0_i32_0 = arith.constant 0 : i32
    %c0_i32_1 = arith.constant 0 : i32
    return %c0_i32, %c0_i32_0 : i32, i32
  }
  func.func @transform_5(%arg0: i32) -> (i32, i32) {
    %c0_i32 = arith.constant 0 : i32
    %c0_i32_0 = arith.constant 0 : i32
    return %arg0, %c0_i32 : i32, i32
  }
}

</mosaic_0001>

<llo_original>
// kernel: tpu_custom_call.1
$region0: #{tpu_custom_call.1}
  #allocation0 [shape = 'u32[]', space=smem, size = 0x4, offset = 0x4, fixed_abs, tag = 'smem constant byte address 0x4 - core index']
  #allocation1 [shape = 'u32[144,128]{1,0:T(1,128)}', space=vmem, size = 0x12000, scoped, tag = 'internal scratch']
  %s0 = inlined_call_operand.hbm [shape: s32[64,128], index: 0, kind: input, shape index: {}]
  %s1 = inlined_call_operand.hbm [shape: f32[64,128], index: 1, kind: input, shape index: {}]
  %s2 = inlined_call_operand.hbm [shape: bf16[128,128], index: 2, kind: input, shape index: {}]
  %s3 = inlined_call_operand.hbm [shape: f32[128,128], index: 3, kind: input, shape index: {}]
  %s4 = inlined_call_operand.vmem [shape: f32[1,128], index: 4, kind: input, shape index: {}]
  %s5 = inlined_call_operand.hbm [shape: f32[64,128], index: 5, kind: output, shape index: {}]
  %s6 = sld [smem:[#allocation0]]
  $region69: #{tpu_custom_call.1} parent=0
    _
  %s8 = ssub.s32 1, %s6
  %s9 = scalar_select 0, %s8, %s6
  $region1: #{tpu_custom_call.1} parent=0
    #allocation2 [shape = 'u8[16384]{0}', space=vmem, size = 0x4000, scoped, tag = 'input window, operand 0']
    #allocation3 [shape = 's32[2]{0}', space=sflag, size = 0x8, scoped, tag = 'scoped memory for tpu_custom_call.1']
    #allocation4 [shape = 's32[2]{0}', space=sflag, size = 0x8, scoped, tag = 'scoped memory for tpu_custom_call.1']
    #allocation5 [shape = 'u8[16384]{0}', space=vmem, size = 0x4000, scoped, tag = 'input window, operand 1']
    #allocation6 [shape = 's32[2]{0}', space=sflag, size = 0x8, scoped, tag = 'scoped memory for tpu_custom_call.1']
    #allocation7 [shape = 'u8[32768]{0}', space=vmem, size = 0x8000, scoped, tag = 'input window, operand 2, single buffered']
    #allocation8 [shape = 'u8[65536]{0}', space=vmem, size = 0x10000, scoped, tag = 'input window, operand 3, single buffered']
    #allocation9 [shape = 's32[1]{0}', space=sflag, size = 0x4, scoped, tag = 'scoped memory for tpu_custom_call.1']
    #allocation10 [shape = 'u8[16384]{0}', space=vmem, size = 0x4000, scoped, tag = 'output window, operand 0']
    %10 = vsyncpa [#allocation3], 0
    %s11 = scalar_lea.sflag [#allocation3], 1
    %12 = vsyncpa %s11, 0
    %13 = vsyncpa [#allocation6], 0
    %s14 = scalar_lea.sflag [#allocation6], 1
    %15 = vsyncpa %s14, 0
    %16 = vsyncpa [#allocation9], 0
    %17 = vsyncpa [#allocation4], 0
    %s18 = scalar_lea.sflag [#allocation4], 1
    %19 = vsyncpa %s18, 0
    loop: start=0, step=1, limit=6
    $region2: #{tpu_custom_call.1} parent=1 // loop_pre_header
      _
    $region3: #{tpu_custom_call.1} parent=1 // loop_header
      %s21 = sphi 0, %s25
      %p22 = scmp.ge.s32.totalorder %s21, 6
      %s31 = sphi 0, %s33
      %s34 = sphi 0, %s31
      %s35 = sphi 0, %s34
      %s51 = sphi 0, %s35
      %s57 = sphi 0, %s59
      %s60 = sphi 0, %s57
      %s61 = sphi 0, %s60
      %s77 = sphi 0, %s61
      %s81 = sphi 0, %s81
      %s83 = sphi 0, %s81
      %s84 = sphi 0, %s83
      %s98 = sphi 0, %s84
      %s102 = sphi 0, %s102
      %s104 = sphi 0, %s102
      %s105 = sphi 0, %s104
      %s119 = sphi 0, %s105
      %s123 = sphi 0, %s123
      %s125 = sphi 0, %s123
      %s126 = sphi 0, %s125
      %s140 = sphi 0, %s126
      %s146 = sphi 0, %s148
      %s149 = sphi 0, %s146
      %s150 = sphi 0, %s149
      %s166 = sphi 0, %s150
    $region4: #{tpu_custom_call.1} parent=1 // loop_header_branch
      %24 = sbr.rel (%p22) target = $region8
    $region5: #{tpu_custom_call.1} parent=1 // loop_body
      %s26 = ssub.s32 %s21, 1
      %s27 = ssub.s32 %s21, 2
      %s28 = sadd.s32 %s21, 1
      %s29 = ssub.s32 %s21, %s28
      %p30 = scmp.eq.s32.totalorder %s29, 0
      %s32 = sadd.s32 %s31, 1
      %s33 = scalar_select %p30, %s31, %s32
      %p36 = pneg %p30
      %p37 = scmp.eq.s32.totalorder %s21, 3
      %p38 = por %p36, %p37
      %p39 = scmp.ne.s32.totalorder %s31, %s34
      %p40 = scmp.eq.s32.totalorder %s21, 0
      %p41 = por %p39, %p40
      %p42 = scmp.ne.s32.totalorder %s31, %s34
      %p43 = scmp.eq.s32.totalorder %s26, 3
      %p44 = por %p42, %p43
      %p45 = scmp.ne.s32.totalorder %s34, %s35
      %p46 = scmp.eq.s32.totalorder %s26, 0
      %p47 = por %p45, %p46
      %p48 = scmp.ne.s32.totalorder %s34, %s35
      %p49 = scmp.eq.s32.totalorder %s27, 3
      %p50 = por %p48, %p49
      %p52 = scmp.ne.s32.totalorder %s35, %s51
      %p53 = scmp.eq.s32.totalorder %s27, 0
      %p54 = por %p52, %p53
      %s55 = ssub.s32 %s21, %s28
      %p56 = scmp.eq.s32.totalorder %s55, 0
      %s58 = sadd.s32 %s57, 1
      %s59 = scalar_select %p56, %s57, %s58
      %p62 = pneg %p56
      %p63 = scmp.eq.s32.totalorder %s21, 3
      %p64 = por %p62, %p63
      %p65 = scmp.ne.s32.totalorder %s57, %s60
      %p66 = scmp.eq.s32.totalorder %s21, 0
      %p67 = por %p65, %p66
      %p68 = scmp.ne.s32.totalorder %s57, %s60
      %p69 = scmp.eq.s32.totalorder %s26, 3
      %p70 = por %p68, %p69
      %p71 = scmp.ne.s32.totalorder %s60, %s61
      %p72 = scmp.eq.s32.totalorder %s26, 0
      %p73 = por %p71, %p72
      %p74 = scmp.ne.s32.totalorder %s60, %s61
      %p75 = scmp.eq.s32.totalorder %s27, 3
      %p76 = por %p74, %p75
      %p78 = scmp.ne.s32.totalorder %s61, %s77
      %p79 = scmp.eq.s32.totalorder %s27, 0
      %p80 = por %p78, %p79
      %s82 = sadd.s32 %s81, 1
      %p85 = scmp.eq.s32.totalorder %s21, 3
      %p86 = scmp.ne.s32.totalorder %s81, %s83
      %p87 = scmp.eq.s32.totalorder %s21, 0
      %p88 = por %p86, %p87
      %p89 = scmp.ne.s32.totalorder %s81, %s83
      %p90 = scmp.eq.s32.totalorder %s26, 3
      %p91 = por %p89, %p90
      %p92 = scmp.ne.s32.totalorder %s83, %s84
      %p93 = scmp.eq.s32.totalorder %s26, 0
      %p94 = por %p92, %p93
      %p95 = scmp.ne.s32.totalorder %s83, %s84
      %p96 = scmp.eq.s32.totalorder %s27, 3
      %p97 = por %p95, %p96
      %p99 = scmp.ne.s32.totalorder %s84, %s98
      %p100 = scmp.eq.s32.totalorder %s27, 0
      %p101 = por %p99, %p100
      %s103 = sadd.s32 %s102, 1
      %p106 = scmp.eq.s32.totalorder %s21, 3
      %p107 = scmp.ne.s32.totalorder %s102, %s104
      %p108 = scmp.eq.s32.totalorder %s21, 0
      %p109 = por %p107, %p108
      %p110 = scmp.ne.s32.totalorder %s102, %s104
      %p111 = scmp.eq.s32.totalorder %s26, 3
      %p112 = por %p110, %p111
      %p113 = scmp.ne.s32.totalorder %s104, %s105
      %p114 = scmp.eq.s32.totalorder %s26, 0
      %p115 = por %p113, %p114
      %p116 = scmp.ne.s32.totalorder %s104, %s105
      %p117 = scmp.eq.s32.totalorder %s27, 3
      %p118 = por %p116, %p117
      %p120 = scmp.ne.s32.totalorder %s105, %s119
      %p121 = scmp.eq.s32.totalorder %s27, 0
      %p122 = por %p120, %p121
      %s124 = sadd.s32 %s123, 1
      %p127 = scmp.eq.s32.totalorder %s21, 3
      %p128 = scmp.ne.s32.totalorder %s123, %s125
      %p129 = scmp.eq.s32.totalorder %s21, 0
      %p130 = por %p128, %p129
      %p131 = scmp.ne.s32.totalorder %s123, %s125
      %p132 = scmp.eq.s32.totalorder %s26, 3
      %p133 = por %p131, %p132
      %p134 = scmp.ne.s32.totalorder %s125, %s126
      %p135 = scmp.eq.s32.totalorder %s26, 0
      %p136 = por %p134, %p135
      %p137 = scmp.ne.s32.totalorder %s125, %s126
      %p138 = scmp.eq.s32.totalorder %s27, 3
      %p139 = por %p137, %p138
      %p141 = scmp.ne.s32.totalorder %s126, %s140
      %p142 = scmp.eq.s32.totalorder %s27, 0
      %p143 = por %p141, %p142
      %s144 = ssub.s32 %s21, %s28
      %p145 = scmp.eq.s32.totalorder %s144, 0
      %s147 = sadd.s32 %s146, 1
      %s148 = scalar_select %p145, %s146, %s147
      %p151 = pneg %p145
      %p152 = scmp.eq.s32.totalorder %s21, 3
      %p153 = por %p151, %p152
      %p154 = scmp.ne.s32.totalorder %s146, %s149
      %p155 = scmp.eq.s32.totalorder %s21, 0
      %p156 = por %p154, %p155
      %p157 = scmp.ne.s32.totalorder %s146, %s149
      %p158 = scmp.eq.s32.totalorder %s26, 3
      %p159 = por %p157, %p158
      %p160 = scmp.ne.s32.totalorder %s149, %s150
      %p161 = scmp.eq.s32.totalorder %s26, 0
      %p162 = por %p160, %p161
      %p163 = scmp.ne.s32.totalorder %s149, %s150
      %p164 = scmp.eq.s32.totalorder %s27, 3
      %p165 = por %p163, %p164
      %p167 = scmp.ne.s32.totalorder %s150, %s166
      %p168 = scmp.eq.s32.totalorder %s27, 0
      %p169 = por %p167, %p168
      %p170 = scmp.le.s32.totalorder 1, %s21
      %p171 = scmp.lt.s32.totalorder %s21, 5
      %p172 = pnand %p170, %p171
      %p173 = pneg %p172
      // Predicated region
      $region9: #{tpu_custom_call.1} parent=5 // pred_check
        _
      $region10: #{tpu_custom_call.1} parent=5 // pred_check_branch
        %175 = sbr.rel (%p172) target = $region12
      $region11: #{tpu_custom_call.1} parent=5 // pred_region
        %s176 = ssub.s32 %s21, 1
        // Predicated region
        $region13: #{tpu_custom_call.1} parent=11 // pred_check
          %p177 = pneg %p94
        $region14: #{tpu_custom_call.1} parent=11 // pred_check_branch
          %179 = sbr.rel (%p177) target = $region16
        $region15: #{tpu_custom_call.1} parent=11 // pred_region
          %s181 = ssub.s32 1024, 1024
          %182 = vsyncadd [#allocation6], %s181
          %s183 = sshll.u32 [#allocation7], 4
          %s184 = int_to_ptr.vmem [resolvable:$true] %s183
          %189 = dma.hbm_to_vmem [thread:$0]  %s2, 1024, %s184, [#allocation6], 64, 64, 4
        $region16: #{tpu_custom_call.1} parent=11 // pred_fallthru
          _
        // Predicated region
        $region17: #{tpu_custom_call.1} parent=11 // pred_check
          %p190 = pneg %p115
        $region18: #{tpu_custom_call.1} parent=11 // pred_check_branch
          %192 = sbr.rel (%p190) target = $region20
        $region19: #{tpu_custom_call.1} parent=11 // pred_region
          %s194 = ssub.s32 2048, 2048
          %195 = vsyncadd [#allocation9], %s194
          %s196 = sshll.u32 [#allocation8], 4
          %s197 = int_to_ptr.vmem [resolvable:$true] %s196
          %202 = dma.hbm_to_vmem [thread:$0]  %s3, 2048, %s197, [#allocation9], 128, 128, 8
        $region20: #{tpu_custom_call.1} parent=11 // pred_fallthru
          _
        // Predicated region
        $region21: #{tpu_custom_call.1} parent=11 // pred_check
          %p203 = pneg %p136
        $region22: #{tpu_custom_call.1} parent=11 // pred_check_branch
          %205 = sbr.rel (%p203) target = $region24
        $region23: #{tpu_custom_call.1} parent=11 // pred_region
          _
        $region24: #{tpu_custom_call.1} parent=11 // pred_fallthru
          _
      $region12: #{tpu_custom_call.1} parent=5 // pred_fallthru
        _
      %p206 = scmp.lt.s32.totalorder %s21, 4
      // Predicated region
      $region25: #{tpu_custom_call.1} parent=5 // pred_check
        %p207 = pneg %p206
      $region26: #{tpu_custom_call.1} parent=5 // pred_check_branch
        %209 = sbr.rel (%p207) target = $region28
      $region27: #{tpu_custom_call.1} parent=5 // pred_region
        // Predicated region
        $region29: #{tpu_custom_call.1} parent=27 // pred_check
          %p210 = pneg %p41
        $region30: #{tpu_custom_call.1} parent=27 // pred_check_branch
          %212 = sbr.rel (%p210) target = $region32
        $region31: #{tpu_custom_call.1} parent=27 // pred_region
          %s213 = sand.u32 %s31, 1
          %s214 = scalar_lea.sflag [#allocation3], %s213
          %s215 = sand.u32 %s31, 1
          %s216 = smul.addr %s215, 16
          %s217 = scalar_lea.vmem [#allocation2], %s216
          %s218 = smul.u32 2, %s21
          %s220 = ssub.s32 256, 256
          %221 = vsyncadd %s214, %s220
          %s222 = smul.addr %s218, 128
          %s223 = scalar_lea.hbm %s0, %s222
          %s224 = sshll.u32 %s217, 4
          %s225 = int_to_ptr.vmem [resolvable:$true] %s224
          %230 = dma.hbm_to_vmem [thread:$0]  %s223, 256, %s225, %s214, 128, 128, 8
        $region32: #{tpu_custom_call.1} parent=27 // pred_fallthru
          _
        // Predicated region
        $region33: #{tpu_custom_call.1} parent=27 // pred_check
          %p231 = pneg %p67
        $region34: #{tpu_custom_call.1} parent=27 // pred_check_branch
          %233 = sbr.rel (%p231) target = $region36
        $region35: #{tpu_custom_call.1} parent=27 // pred_region
          %s234 = sand.u32 %s21, 1
          %s235 = scalar_lea.sflag [#allocation6], %s234
          %s236 = sand.u32 %s57, 1
          %s237 = smul.addr %s236, 16
          %s238 = scalar_lea.vmem [#allocation5], %s237
          %s239 = smul.u32 2, %s21
          %s241 = ssub.s32 256, 256
          %242 = vsyncadd %s235, %s241
          %s243 = smul.addr %s239, 128
          %s244 = scalar_lea.hbm %s1, %s243
          %s245 = sshll.u32 %s238, 4
          %s246 = int_to_ptr.vmem [resolvable:$true] %s245
          %251 = dma.hbm_to_vmem [thread:$0]  %s244, 256, %s246, %s235, 128, 128, 8
        $region36: #{tpu_custom_call.1} parent=27 // pred_fallthru
          _
      $region28: #{tpu_custom_call.1} parent=5 // pred_fallthru
        _
      %p252 = scmp.le.s32.totalorder 1, %s21
      %p253 = scmp.lt.s32.totalorder %s21, 5
      %p254 = pnand %p252, %p253
      %p255 = pneg %p254
      // Predicated region
      $region37: #{tpu_custom_call.1} parent=5 // pred_check
        _
      $region38: #{tpu_custom_call.1} parent=5 // pred_check_branch
        %257 = sbr.rel (%p254) target = $region40
      $region39: #{tpu_custom_call.1} parent=5 // pred_region
        %s258 = ssub.s32 %s21, 1
        %s259 = sand.u32 %s34, 1
        %s260 = scalar_lea.sflag [#allocation3], %s259
        %s261 = sand.u32 %s34, 1
        %s262 = smul.addr %s261, 16
        %s263 = scalar_lea.vmem [#allocation2], %s262
        // Predicated region
        $region41: #{tpu_custom_call.1} parent=39 // pred_check
          %p264 = pneg %p47
        $region42: #{tpu_custom_call.1} parent=39 // pred_check_branch
          %266 = sbr.rel (%p264) target = $region44
        $region43: #{tpu_custom_call.1} parent=39 // pred_region
          %267 = dma.done %s260, 256
        $region44: #{tpu_custom_call.1} parent=39 // pred_fallthru
          _
        %s268 = sand.u32 %s26, 1
        %s269 = scalar_lea.sflag [#allocation6], %s268
        %s270 = sand.u32 %s60, 1
        %s271 = smul.addr %s270, 16
        %s272 = scalar_lea.vmem [#allocation5], %s271
        // Predicated region
        $region45: #{tpu_custom_call.1} parent=39 // pred_check
          %p273 = pneg %p73
        $region46: #{tpu_custom_call.1} parent=39 // pred_check_branch
          %275 = sbr.rel (%p273) target = $region48
        $region47: #{tpu_custom_call.1} parent=39 // pred_region
          %276 = dma.done %s269, 256
        $region48: #{tpu_custom_call.1} parent=39 // pred_fallthru
          _
        // Predicated region
        $region49: #{tpu_custom_call.1} parent=39 // pred_check
          %p277 = pneg %p94
        $region50: #{tpu_custom_call.1} parent=39 // pred_check_branch
          %279 = sbr.rel (%p277) target = $region52
        $region51: #{tpu_custom_call.1} parent=39 // pred_region
          %280 = dma.done [#allocation6], 1024
        $region52: #{tpu_custom_call.1} parent=39 // pred_fallthru
          _
        // Predicated region
        $region53: #{tpu_custom_call.1} parent=39 // pred_check
          %p281 = pneg %p115
        $region54: #{tpu_custom_call.1} parent=39 // pred_check_branch
          %283 = sbr.rel (%p281) target = $region56
        $region55: #{tpu_custom_call.1} parent=39 // pred_region
          %284 = dma.done [#allocation9], 2048
        $region56: #{tpu_custom_call.1} parent=39 // pred_fallthru
          _
        %s285 = sand.u32 %s34, 1
        %s286 = scalar_lea.sflag [#allocation3], %s285
        %s287 = sand.u32 %s34, 1
        %s288 = smul.addr %s287, 16
        %s289 = scalar_lea.vmem [#allocation2], %s288
        %p290 = pneg %p47
        %p291 = pneg %p44
        %s292 = sand.u32 %s26, 1
        %s293 = scalar_lea.sflag [#allocation6], %s292
        %s294 = sand.u32 %s60, 1
        %s295 = smul.addr %s294, 16
        %s296 = scalar_lea.vmem [#allocation5], %s295
        %p297 = pneg %p73
        %p298 = pneg %p70
        %p299 = pneg %p94
        %p300 = pneg %p91
        %p301 = pneg %p115
        %p302 = pneg %p112
        %p303 = pneg %p136
        %p304 = pneg %p133
        %p305 = pneg %p162
        %p306 = pneg %p159
        %s307 = sand.u32 %s149, 1
        %s308 = scalar_lea.sflag [#allocation4], %s307
        %s309 = sand.u32 %s149, 1
        %s310 = smul.addr %s309, 16
        %s311 = scalar_lea.vmem [#allocation10], %s310
        %s312 = smul.u32 2, %s26
        %s313 = smul.u32 2, %s26
        %s314 = smul.u32 2, %s26
        %v316 = vld [vmem:[%s263] sm:$0xff]
        %v317 = vld [vmem:[%s263 + $0x8] sm:$0xff]
        %v318 = vld [vmem:[%s272] sm:$0xff]
        %v319 = vld [vmem:[%s272 + $0x8] sm:$0xff]
        %v320 = vlaneseq
        %v321 = vand.u32 %v320, 127
        %v322 = vlaneseq
        %v323 = vshrl.u32 %v322, 7
        %v324 = vsub.s32 0, %v323
        %v325 = vrot.slane %v316, %v324
        %327 = vbcast.lane.b32.xlu0 %v325, 256
        %v328 = vpop.permute.xlu0 %327
        %s330 = sor.u32 256, 8
        %331 = vbcast.lane.b32.xlu0 %v325, %s330
        %v332 = vpop.permute.xlu0 %331
        %s334 = sor.u32 256, 16
        %335 = vbcast.lane.b32.xlu0 %v325, %s334
        %v336 = vpop.permute.xlu0 %335
        %s338 = sor.u32 256, 24
        %339 = vbcast.lane.b32.xlu0 %v325, %s338
        %v340 = vpop.permute.xlu0 %339
        %s342 = sor.u32 256, 32
        %343 = vbcast.lane.b32.xlu0 %v325, %s342
        %v344 = vpop.permute.xlu0 %343
        %s346 = sor.u32 256, 40
        %347 = vbcast.lane.b32.xlu0 %v325, %s346
        %v348 = vpop.permute.xlu0 %347
        %s350 = sor.u32 256, 48
        %351 = vbcast.lane.b32.xlu0 %v325, %s350
        %v352 = vpop.permute.xlu0 %351
        %s354 = sor.u32 256, 56
        %355 = vbcast.lane.b32.xlu0 %v325, %s354
        %v356 = vpop.permute.xlu0 %355
        %s358 = sor.u32 256, 64
        %359 = vbcast.lane.b32.xlu0 %v325, %s358
        %v360 = vpop.permute.xlu0 %359
        %s362 = sor.u32 256, 72
        %363 = vbcast.lane.b32.xlu0 %v325, %s362
        %v364 = vpop.permute.xlu0 %363
        %s366 = sor.u32 256, 80
        %367 = vbcast.lane.b32.xlu0 %v325, %s366
        %v368 = vpop.permute.xlu0 %367
        %s370 = sor.u32 256, 88
        %371 = vbcast.lane.b32.xlu0 %v325, %s370
        %v372 = vpop.permute.xlu0 %371
        %s374 = sor.u32 256, 96
        %375 = vbcast.lane.b32.xlu0 %v325, %s374
        %v376 = vpop.permute.xlu0 %375
        %s378 = sor.u32 256, 104
        %379 = vbcast.lane.b32.xlu0 %v325, %s378
        %v380 = vpop.permute.xlu0 %379
        %s382 = sor.u32 256, 112
        %383 = vbcast.lane.b32.xlu0 %v325, %s382
        %v384 = vpop.permute.xlu0 %383
        %s386 = sor.u32 256, 120
        %387 = vbcast.lane.b32.xlu0 %v325, %s386
        %v388 = vpop.permute.xlu0 %387
        %v389 = vlaneseq
        %v390 = vshrl.u32 %v389, 7
        %v391 = vsub.s32 1, %v390
        %v392 = vrot.slane %v316, %v391
        %394 = vbcast.lane.b32.xlu0 %v392, 256
        %v395 = vpop.permute.xlu0 %394
        %s397 = sor.u32 256, 8
        %398 = vbcast.lane.b32.xlu0 %v392, %s397
        %v399 = vpop.permute.xlu0 %398
        %s401 = sor.u32 256, 16
        %402 = vbcast.lane.b32.xlu0 %v392, %s401
        %v403 = vpop.permute.xlu0 %402
        %s405 = sor.u32 256, 24
        %406 = vbcast.lane.b32.xlu0 %v392, %s405
        %v407 = vpop.permute.xlu0 %406
        %s409 = sor.u32 256, 32
        %410 = vbcast.lane.b32.xlu0 %v392, %s409
        %v411 = vpop.permute.xlu0 %410
        %s413 = sor.u32 256, 40
        %414 = vbcast.lane.b32.xlu0 %v392, %s413
        %v415 = vpop.permute.xlu0 %414
        %s417 = sor.u32 256, 48
        %418 = vbcast.lane.b32.xlu0 %v392, %s417
        %v419 = vpop.permute.xlu0 %418
        %s421 = sor.u32 256, 56
        %422 = vbcast.lane.b32.xlu0 %v392, %s421
        %v423 = vpop.permute.xlu0 %422
        %s425 = sor.u32 256, 64
        %426 = vbcast.lane.b32.xlu0 %v392, %s425
        %v427 = vpop.permute.xlu0 %426
        %s429 = sor.u32 256, 72
        %430 = vbcast.lane.b32.xlu0 %v392, %s429
        %v431 = vpop.permute.xlu0 %430
        %s433 = sor.u32 256, 80
        %434 = vbcast.lane.b32.xlu0 %v392, %s433
        %v435 = vpop.permute.xlu0 %434
        %s437 = sor.u32 256, 88
        %438 = vbcast.lane.b32.xlu0 %v392, %s437
        %v439 = vpop.permute.xlu0 %438
        %s441 = sor.u32 256, 96
        %442 = vbcast.lane.b32.xlu0 %v392, %s441
        %v443 = vpop.permute.xlu0 %442
        %s445 = sor.u32 256, 104
        %446 = vbcast.lane.b32.xlu0 %v392, %s445
        %v447 = vpop.permute.xlu0 %446
        %s449 = sor.u32 256, 112
        %450 = vbcast.lane.b32.xlu0 %v392, %s449
        %v451 = vpop.permute.xlu0 %450
        %s453 = sor.u32 256, 120
        %454 = vbcast.lane.b32.xlu0 %v392, %s453
        %v455 = vpop.permute.xlu0 %454
        %v456 = vlaneseq
        %v457 = vshrl.u32 %v456, 7
        %v458 = vsub.s32 2, %v457
        %v459 = vrot.slane %v316, %v458
        %461 = vbcast.lane.b32.xlu0 %v459, 256
        %v462 = vpop.permute.xlu0 %461
        %s464 = sor.u32 256, 8
        %465 = vbcast.lane.b32.xlu0 %v459, %s464
        %v466 = vpop.permute.xlu0 %465
        %s468 = sor.u32 256, 16
        %469 = vbcast.lane.b32.xlu0 %v459, %s468
        %v470 = vpop.permute.xlu0 %469
        %s472 = sor.u32 256, 24
        %473 = vbcast.lane.b32.xlu0 %v459, %s472
        %v474 = vpop.permute.xlu0 %473
        %s476 = sor.u32 256, 32
        %477 = vbcast.lane.b32.xlu0 %v459, %s476
        %v478 = vpop.permute.xlu0 %477
        %s480 = sor.u32 256, 40
        %481 = vbcast.lane.b32.xlu0 %v459, %s480
        %v482 = vpop.permute.xlu0 %481
        %s484 = sor.u32 256, 48
        %485 = vbcast.lane.b32.xlu0 %v459, %s484
        %v486 = vpop.permute.xlu0 %485
        %s488 = sor.u32 256, 56
        %489 = vbcast.lane.b32.xlu0 %v459, %s488
        %v490 = vpop.permute.xlu0 %489
        %s492 = sor.u32 256, 64
        %493 = vbcast.lane.b32.xlu0 %v459, %s492
        %v494 = vpop.permute.xlu0 %493
        %s496 = sor.u32 256, 72
        %497 = vbcast.lane.b32.xlu0 %v459, %s496
        %v498 = vpop.permute.xlu0 %497
        %s500 = sor.u32 256, 80
        %501 = vbcast.lane.b32.xlu0 %v459, %s500
        %v502 = vpop.permute.xlu0 %501
        %s504 = sor.u32 256, 88
        %505 = vbcast.lane.b32.xlu0 %v459, %s504
        %v506 = vpop.permute.xlu0 %505
        %s508 = sor.u32 256, 96
        %509 = vbcast.lane.b32.xlu0 %v459, %s508
        %v510 = vpop.permute.xlu0 %509
        %s512 = sor.u32 256, 104
        %513 = vbcast.lane.b32.xlu0 %v459, %s512
        %v514 = vpop.permute.xlu0 %513
        %s516 = sor.u32 256, 112
        %517 = vbcast.lane.b32.xlu0 %v459, %s516
        %v518 = vpop.permute.xlu0 %517
        %s520 = sor.u32 256, 120
        %521 = vbcast.lane.b32.xlu0 %v459, %s520
        %v522 = vpop.permute.xlu0 %521
        %v523 = vlaneseq
        %v524 = vshrl.u32 %v523, 7
        %v525 = vsub.s32 3, %v524
        %v526 = vrot.slane %v316, %v525
        %528 = vbcast.lane.b32.xlu0 %v526, 256
        %v529 = vpop.permute.xlu0 %528
        %s531 = sor.u32 256, 8
        %532 = vbcast.lane.b32.xlu0 %v526, %s531
        %v533 = vpop.permute.xlu0 %532
        %s535 = sor.u32 256, 16
        %536 = vbcast.lane.b32.xlu0 %v526, %s535
        %v537 = vpop.permute.xlu0 %536
        %s539 = sor.u32 256, 24
        %540 = vbcast.lane.b32.xlu0 %v526, %s539
        %v541 = vpop.permute.xlu0 %540
        %s543 = sor.u32 256, 32
        %544 = vbcast.lane.b32.xlu0 %v526, %s543
        %v545 = vpop.permute.xlu0 %544
        %s547 = sor.u32 256, 40
        %548 = vbcast.lane.b32.xlu0 %v526, %s547
        %v549 = vpop.permute.xlu0 %548
        %s551 = sor.u32 256, 48
        %552 = vbcast.lane.b32.xlu0 %v526, %s551
        %v553 = vpop.permute.xlu0 %552
        %s555 = sor.u32 256, 56
        %556 = vbcast.lane.b32.xlu0 %v526, %s555
        %v557 = vpop.permute.xlu0 %556
        %s559 = sor.u32 256, 64
        %560 = vbcast.lane.b32.xlu0 %v526, %s559
        %v561 = vpop.permute.xlu0 %560
        %s563 = sor.u32 256, 72
        %564 = vbcast.lane.b32.xlu0 %v526, %s563
        %v565 = vpop.permute.xlu0 %564
        %s567 = sor.u32 256, 80
        %568 = vbcast.lane.b32.xlu0 %v526, %s567
        %v569 = vpop.permute.xlu0 %568
        %s571 = sor.u32 256, 88
        %572 = vbcast.lane.b32.xlu0 %v526, %s571
        %v573 = vpop.permute.xlu0 %572
        %s575 = sor.u32 256, 96
        %576 = vbcast.lane.b32.xlu0 %v526, %s575
        %v577 = vpop.permute.xlu0 %576
        %s579 = sor.u32 256, 104
        %580 = vbcast.lane.b32.xlu0 %v526, %s579
        %v581 = vpop.permute.xlu0 %580
        %s583 = sor.u32 256, 112
        %584 = vbcast.lane.b32.xlu0 %v526, %s583
        %v585 = vpop.permute.xlu0 %584
        %s587 = sor.u32 256, 120
        %588 = vbcast.lane.b32.xlu0 %v526, %s587
        %v589 = vpop.permute.xlu0 %588
        %v590 = vlaneseq
        %v591 = vshrl.u32 %v590, 7
        %v592 = vsub.s32 4, %v591
        %v593 = vrot.slane %v316, %v592
        %595 = vbcast.lane.b32.xlu0 %v593, 256
        %v596 = vpop.permute.xlu0 %595
        %s598 = sor.u32 256, 8
        %599 = vbcast.lane.b32.xlu0 %v593, %s598
        %v600 = vpop.permute.xlu0 %599
        %s602 = sor.u32 256, 16
        %603 = vbcast.lane.b32.xlu0 %v593, %s602
        %v604 = vpop.permute.xlu0 %603
        %s606 = sor.u32 256, 24
        %607 = vbcast.lane.b32.xlu0 %v593, %s606
        %v608 = vpop.permute.xlu0 %607
        %s610 = sor.u32 256, 32
        %611 = vbcast.lane.b32.xlu0 %v593, %s610
        %v612 = vpop.permute.xlu0 %611
        %s614 = sor.u32 256, 40
        %615 = vbcast.lane.b32.xlu0 %v593, %s614
        %v616 = vpop.permute.xlu0 %615
        %s618 = sor.u32 256, 48
        %619 = vbcast.lane.b32.xlu0 %v593, %s618
        %v620 = vpop.permute.xlu0 %619
        %s622 = sor.u32 256, 56
        %623 = vbcast.lane.b32.xlu0 %v593, %s622
        %v624 = vpop.permute.xlu0 %623
        %s626 = sor.u32 256, 64
        %627 = vbcast.lane.b32.xlu0 %v593, %s626
        %v628 = vpop.permute.xlu0 %627
        %s630 = sor.u32 256, 72
        %631 = vbcast.lane.b32.xlu0 %v593, %s630
        %v632 = vpop.permute.xlu0 %631
        %s634 = sor.u32 256, 80
        %635 = vbcast.lane.b32.xlu0 %v593, %s634
        %v636 = vpop.permute.xlu0 %635
        %s638 = sor.u32 256, 88
        %639 = vbcast.lane.b32.xlu0 %v593, %s638
        %v640 = vpop.permute.xlu0 %639
        %s642 = sor.u32 256, 96
        %643 = vbcast.lane.b32.xlu0 %v593, %s642
        %v644 = vpop.permute.xlu0 %643
        %s646 = sor.u32 256, 104
        %647 = vbcast.lane.b32.xlu0 %v593, %s646
        %v648 = vpop.permute.xlu0 %647
        %s650 = sor.u32 256, 112
        %651 = vbcast.lane.b32.xlu0 %v593, %s650
        %v652 = vpop.permute.xlu0 %651
        %s654 = sor.u32 256, 120
        %655 = vbcast.lane.b32.xlu0 %v593, %s654
        %v656 = vpop.permute.xlu0 %655
        %v657 = vlaneseq
        %v658 = vshrl.u32 %v657, 7
        %v659 = vsub.s32 5, %v658
        %v660 = vrot.slane %v316, %v659
        %662 = vbcast.lane.b32.xlu0 %v660, 256
        %v663 = vpop.permute.xlu0 %662
        %s665 = sor.u32 256, 8
        %666 = vbcast.lane.b32.xlu0 %v660, %s665
        %v667 = vpop.permute.xlu0 %666
        %s669 = sor.u32 256, 16
        %670 = vbcast.lane.b32.xlu0 %v660, %s669
        %v671 = vpop.permute.xlu0 %670
        %s673 = sor.u32 256, 24
        %674 = vbcast.lane.b32.xlu0 %v660, %s673
        %v675 = vpop.permute.xlu0 %674
        %s677 = sor.u32 256, 32
        %678 = vbcast.lane.b32.xlu0 %v660, %s677
        %v679 = vpop.permute.xlu0 %678
        %s681 = sor.u32 256, 40
        %682 = vbcast.lane.b32.xlu0 %v660, %s681
        %v683 = vpop.permute.xlu0 %682
        %s685 = sor.u32 256, 48
        %686 = vbcast.lane.b32.xlu0 %v660, %s685
        %v687 = vpop.permute.xlu0 %686
        %s689 = sor.u32 256, 56
        %690 = vbcast.lane.b32.xlu0 %v660, %s689
        %v691 = vpop.permute.xlu0 %690
        %s693 = sor.u32 256, 64
        %694 = vbcast.lane.b32.xlu0 %v660, %s693
        %v695 = vpop.permute.xlu0 %694
        %s697 = sor.u32 256, 72
        %698 = vbcast.lane.b32.xlu0 %v660, %s697
        %v699 = vpop.permute.xlu0 %698
        %s701 = sor.u32 256, 80
        %702 = vbcast.lane.b32.xlu0 %v660, %s701
        %v703 = vpop.permute.xlu0 %702
        %s705 = sor.u32 256, 88
        %706 = vbcast.lane.b32.xlu0 %v660, %s705
        %v707 = vpop.permute.xlu0 %706
        %s709 = sor.u32 256, 96
        %710 = vbcast.lane.b32.xlu0 %v660, %s709
        %v711 = vpop.permute.xlu0 %710
        %s713 = sor.u32 256, 104
        %714 = vbcast.lane.b32.xlu0 %v660, %s713
        %v715 = vpop.permute.xlu0 %714
        %s717 = sor.u32 256, 112
        %718 = vbcast.lane.b32.xlu0 %v660, %s717
        %v719 = vpop.permute.xlu0 %718
        %s721 = sor.u32 256, 120
        %722 = vbcast.lane.b32.xlu0 %v660, %s721
        %v723 = vpop.permute.xlu0 %722
        %v724 = vlaneseq
        %v725 = vshrl.u32 %v724, 7
        %v726 = vsub.s32 6, %v725
        %v727 = vrot.slane %v316, %v726
        %729 = vbcast.lane.b32.xlu0 %v727, 256
        %v730 = vpop.permute.xlu0 %729
        %s732 = sor.u32 256, 8
        %733 = vbcast.lane.b32.xlu0 %v727, %s732
        %v734 = vpop.permute.xlu0 %733
        %s736 = sor.u32 256, 16
        %737 = vbcast.lane.b32.xlu0 %v727, %s736
        %v738 = vpop.permute.xlu0 %737
        %s740 = sor.u32 256, 24
        %741 = vbcast.lane.b32.xlu0 %v727, %s740
        %v742 = vpop.permute.xlu0 %741
        %s744 = sor.u32 256, 32
        %745 = vbcast.lane.b32.xlu0 %v727, %s744
        %v746 = vpop.permute.xlu0 %745
        %s748 = sor.u32 256, 40
        %749 = vbcast.lane.b32.xlu0 %v727, %s748
        %v750 = vpop.permute.xlu0 %749
        %s752 = sor.u32 256, 48
        %753 = vbcast.lane.b32.xlu0 %v727, %s752
        %v754 = vpop.permute.xlu0 %753
        %s756 = sor.u32 256, 56
        %757 = vbcast.lane.b32.xlu0 %v727, %s756
        %v758 = vpop.permute.xlu0 %757
        %s760 = sor.u32 256, 64
        %761 = vbcast.lane.b32.xlu0 %v727, %s760
        %v762 = vpop.permute.xlu0 %761
        %s764 = sor.u32 256, 72
        %765 = vbcast.lane.b32.xlu0 %v727, %s764
        %v766 = vpop.permute.xlu0 %765
        %s768 = sor.u32 256, 80
        %769 = vbcast.lane.b32.xlu0 %v727, %s768
        %v770 = vpop.permute.xlu0 %769
        %s772 = sor.u32 256, 88
        %773 = vbcast.lane.b32.xlu0 %v727, %s772
        %v774 = vpop.permute.xlu0 %773
        %s776 = sor.u32 256, 96
        %777 = vbcast.lane.b32.xlu0 %v727, %s776
        %v778 = vpop.permute.xlu0 %777
        %s780 = sor.u32 256, 104
        %781 = vbcast.lane.b32.xlu0 %v727, %s780
        %v782 = vpop.permute.xlu0 %781
        %s784 = sor.u32 256, 112
        %785 = vbcast.lane.b32.xlu0 %v727, %s784
        %v786 = vpop.permute.xlu0 %785
        %s788 = sor.u32 256, 120
        %789 = vbcast.lane.b32.xlu0 %v727, %s788
        %v790 = vpop.permute.xlu0 %789
        %v791 = vlaneseq
        %v792 = vshrl.u32 %v791, 7
        %v793 = vsub.s32 7, %v792
        %v794 = vrot.slane %v316, %v793
        %796 = vbcast.lane.b32.xlu0 %v794, 256
        %v797 = vpop.permute.xlu0 %796
        %s799 = sor.u32 256, 8
        %800 = vbcast.lane.b32.xlu0 %v794, %s799
        %v801 = vpop.permute.xlu0 %800
        %s803 = sor.u32 256, 16
        %804 = vbcast.lane.b32.xlu0 %v794, %s803
        %v805 = vpop.permute.xlu0 %804
        %s807 = sor.u32 256, 24
        %808 = vbcast.lane.b32.xlu0 %v794, %s807
        %v809 = vpop.permute.xlu0 %808
        %s811 = sor.u32 256, 32
        %812 = vbcast.lane.b32.xlu0 %v794, %s811
        %v813 = vpop.permute.xlu0 %812
        %s815 = sor.u32 256, 40
        %816 = vbcast.lane.b32.xlu0 %v794, %s815
        %v817 = vpop.permute.xlu0 %816
        %s819 = sor.u32 256, 48
        %820 = vbcast.lane.b32.xlu0 %v794, %s819
        %v821 = vpop.permute.xlu0 %820
        %s823 = sor.u32 256, 56
        %824 = vbcast.lane.b32.xlu0 %v794, %s823
        %v825 = vpop.permute.xlu0 %824
        %s827 = sor.u32 256, 64
        %828 = vbcast.lane.b32.xlu0 %v794, %s827
        %v829 = vpop.permute.xlu0 %828
        %s831 = sor.u32 256, 72
        %832 = vbcast.lane.b32.xlu0 %v794, %s831
        %v833 = vpop.permute.xlu0 %832
        %s835 = sor.u32 256, 80
        %836 = vbcast.lane.b32.xlu0 %v794, %s835
        %v837 = vpop.permute.xlu0 %836
        %s839 = sor.u32 256, 88
        %840 = vbcast.lane.b32.xlu0 %v794, %s839
        %v841 = vpop.permute.xlu0 %840
        %s843 = sor.u32 256, 96
        %844 = vbcast.lane.b32.xlu0 %v794, %s843
        %v845 = vpop.permute.xlu0 %844
        %s847 = sor.u32 256, 104
        %848 = vbcast.lane.b32.xlu0 %v794, %s847
        %v849 = vpop.permute.xlu0 %848
        %s851 = sor.u32 256, 112
        %852 = vbcast.lane.b32.xlu0 %v794, %s851
        %v853 = vpop.permute.xlu0 %852
        %s855 = sor.u32 256, 120
        %856 = vbcast.lane.b32.xlu0 %v794, %s855
        %v857 = vpop.permute.xlu0 %856
        %v858 = vlaneseq
        %v859 = vshrl.u32 %v858, 7
        %v860 = vsub.s32 0, %v859
        %v861 = vrot.slane %v317, %v860
        %863 = vbcast.lane.b32.xlu0 %v861, 256
        %v864 = vpop.permute.xlu0 %863
        %s866 = sor.u32 256, 8
        %867 = vbcast.lane.b32.xlu0 %v861, %s866
        %v868 = vpop.permute.xlu0 %867
        %s870 = sor.u32 256, 16
        %871 = vbcast.lane.b32.xlu0 %v861, %s870
        %v872 = vpop.permute.xlu0 %871
        %s874 = sor.u32 256, 24
        %875 = vbcast.lane.b32.xlu0 %v861, %s874
        %v876 = vpop.permute.xlu0 %875
        %s878 = sor.u32 256, 32
        %879 = vbcast.lane.b32.xlu0 %v861, %s878
        %v880 = vpop.permute.xlu0 %879
        %s882 = sor.u32 256, 40
        %883 = vbcast.lane.b32.xlu0 %v861, %s882
        %v884 = vpop.permute.xlu0 %883
        %s886 = sor.u32 256, 48
        %887 = vbcast.lane.b32.xlu0 %v861, %s886
        %v888 = vpop.permute.xlu0 %887
        %s890 = sor.u32 256, 56
        %891 = vbcast.lane.b32.xlu0 %v861, %s890
        %v892 = vpop.permute.xlu0 %891
        %s894 = sor.u32 256, 64
        %895 = vbcast.lane.b32.xlu0 %v861, %s894
        %v896 = vpop.permute.xlu0 %895
        %s898 = sor.u32 256, 72
        %899 = vbcast.lane.b32.xlu0 %v861, %s898
        %v900 = vpop.permute.xlu0 %899
        %s902 = sor.u32 256, 80
        %903 = vbcast.lane.b32.xlu0 %v861, %s902
        %v904 = vpop.permute.xlu0 %903
        %s906 = sor.u32 256, 88
        %907 = vbcast.lane.b32.xlu0 %v861, %s906
        %v908 = vpop.permute.xlu0 %907
        %s910 = sor.u32 256, 96
        %911 = vbcast.lane.b32.xlu0 %v861, %s910
        %v912 = vpop.permute.xlu0 %911
        %s914 = sor.u32 256, 104
        %915 = vbcast.lane.b32.xlu0 %v861, %s914
        %v916 = vpop.permute.xlu0 %915
        %s918 = sor.u32 256, 112
        %919 = vbcast.lane.b32.xlu0 %v861, %s918
        %v920 = vpop.permute.xlu0 %919
        %s922 = sor.u32 256, 120
        %923 = vbcast.lane.b32.xlu0 %v861, %s922
        %v924 = vpop.permute.xlu0 %923
        %v925 = vlaneseq
        %v926 = vshrl.u32 %v925, 7
        %v927 = vsub.s32 1, %v926
        %v928 = vrot.slane %v317, %v927
        %930 = vbcast.lane.b32.xlu0 %v928, 256
        %v931 = vpop.permute.xlu0 %930
        %s933 = sor.u32 256, 8
        %934 = vbcast.lane.b32.xlu0 %v928, %s933
        %v935 = vpop.permute.xlu0 %934
        %s937 = sor.u32 256, 16
        %938 = vbcast.lane.b32.xlu0 %v928, %s937
        %v939 = vpop.permute.xlu0 %938
        %s941 = sor.u32 256, 24
        %942 = vbcast.lane.b32.xlu0 %v928, %s941
        %v943 = vpop.permute.xlu0 %942
        %s945 = sor.u32 256, 32
        %946 = vbcast.lane.b32.xlu0 %v928, %s945
        %v947 = vpop.permute.xlu0 %946
        %s949 = sor.u32 256, 40
        %950 = vbcast.lane.b32.xlu0 %v928, %s949
        %v951 = vpop.permute.xlu0 %950
        %s953 = sor.u32 256, 48
        %954 = vbcast.lane.b32.xlu0 %v928, %s953
        %v955 = vpop.permute.xlu0 %954
        %s957 = sor.u32 256, 56
        %958 = vbcast.lane.b32.xlu0 %v928, %s957
        %v959 = vpop.permute.xlu0 %958
        %s961 = sor.u32 256, 64
        %962 = vbcast.lane.b32.xlu0 %v928, %s961
        %v963 = vpop.permute.xlu0 %962
        %s965 = sor.u32 256, 72
        %966 = vbcast.lane.b32.xlu0 %v928, %s965
        %v967 = vpop.permute.xlu0 %966
        %s969 = sor.u32 256, 80
        %970 = vbcast.lane.b32.xlu0 %v928, %s969
        %v971 = vpop.permute.xlu0 %970
        %s973 = sor.u32 256, 88
        %974 = vbcast.lane.b32.xlu0 %v928, %s973
        %v975 = vpop.permute.xlu0 %974
        %s977 = sor.u32 256, 96
        %978 = vbcast.lane.b32.xlu0 %v928, %s977
        %v979 = vpop.permute.xlu0 %978
        %s981 = sor.u32 256, 104
        %982 = vbcast.lane.b32.xlu0 %v928, %s981
        %v983 = vpop.permute.xlu0 %982
        %s985 = sor.u32 256, 112
        %986 = vbcast.lane.b32.xlu0 %v928, %s985
        %v987 = vpop.permute.xlu0 %986
        %s989 = sor.u32 256, 120
        %990 = vbcast.lane.b32.xlu0 %v928, %s989
        %v991 = vpop.permute.xlu0 %990
        %v992 = vlaneseq
        %v993 = vshrl.u32 %v992, 7
        %v994 = vsub.s32 2, %v993
        %v995 = vrot.slane %v317, %v994
        %997 = vbcast.lane.b32.xlu0 %v995, 256
        %v998 = vpop.permute.xlu0 %997
        %s1000 = sor.u32 256, 8
        %1001 = vbcast.lane.b32.xlu0 %v995, %s1000
        %v1002 = vpop.permute.xlu0 %1001
        %s1004 = sor.u32 256, 16
        %1005 = vbcast.lane.b32.xlu0 %v995, %s1004
        %v1006 = vpop.permute.xlu0 %1005
        %s1008 = sor.u32 256, 24
        %1009 = vbcast.lane.b32.xlu0 %v995, %s1008
        %v1010 = vpop.permute.xlu0 %1009
        %s1012 = sor.u32 256, 32
        %1013 = vbcast.lane.b32.xlu0 %v995, %s1012
        %v1014 = vpop.permute.xlu0 %1013
        %s1016 = sor.u32 256, 40
        %1017 = vbcast.lane.b32.xlu0 %v995, %s1016
        %v1018 = vpop.permute.xlu0 %1017
        %s1020 = sor.u32 256, 48
        %1021 = vbcast.lane.b32.xlu0 %v995, %s1020
        %v1022 = vpop.permute.xlu0 %1021
        %s1024 = sor.u32 256, 56
        %1025 = vbcast.lane.b32.xlu0 %v995, %s1024
        %v1026 = vpop.permute.xlu0 %1025
        %s1028 = sor.u32 256, 64
        %1029 = vbcast.lane.b32.xlu0 %v995, %s1028
        %v1030 = vpop.permute.xlu0 %1029
        %s1032 = sor.u32 256, 72
        %1033 = vbcast.lane.b32.xlu0 %v995, %s1032
        %v1034 = vpop.permute.xlu0 %1033
        %s1036 = sor.u32 256, 80
        %1037 = vbcast.lane.b32.xlu0 %v995, %s1036
        %v1038 = vpop.permute.xlu0 %1037
        %s1040 = sor.u32 256, 88
        %1041 = vbcast.lane.b32.xlu0 %v995, %s1040
        %v1042 = vpop.permute.xlu0 %1041
        %s1044 = sor.u32 256, 96
        %1045 = vbcast.lane.b32.xlu0 %v995, %s1044
        %v1046 = vpop.permute.xlu0 %1045
        %s1048 = sor.u32 256, 104
        %1049 = vbcast.lane.b32.xlu0 %v995, %s1048
        %v1050 = vpop.permute.xlu0 %1049
        %s1052 = sor.u32 256, 112
        %1053 = vbcast.lane.b32.xlu0 %v995, %s1052
        %v1054 = vpop.permute.xlu0 %1053
        %s1056 = sor.u32 256, 120
        %1057 = vbcast.lane.b32.xlu0 %v995, %s1056
        %v1058 = vpop.permute.xlu0 %1057
        %v1059 = vlaneseq
        %v1060 = vshrl.u32 %v1059, 7
        %v1061 = vsub.s32 3, %v1060
        %v1062 = vrot.slane %v317, %v1061
        %1064 = vbcast.lane.b32.xlu0 %v1062, 256
        %v1065 = vpop.permute.xlu0 %1064
        %s1067 = sor.u32 256, 8
        %1068 = vbcast.lane.b32.xlu0 %v1062, %s1067
        %v1069 = vpop.permute.xlu0 %1068
        %s1071 = sor.u32 256, 16
        %1072 = vbcast.lane.b32.xlu0 %v1062, %s1071
        %v1073 = vpop.permute.xlu0 %1072
        %s1075 = sor.u32 256, 24
        %1076 = vbcast.lane.b32.xlu0 %v1062, %s1075
        %v1077 = vpop.permute.xlu0 %1076
        %s1079 = sor.u32 256, 32
        %1080 = vbcast.lane.b32.xlu0 %v1062, %s1079
        %v1081 = vpop.permute.xlu0 %1080
        %s1083 = sor.u32 256, 40
        %1084 = vbcast.lane.b32.xlu0 %v1062, %s1083
        %v1085 = vpop.permute.xlu0 %1084
        %s1087 = sor.u32 256, 48
        %1088 = vbcast.lane.b32.xlu0 %v1062, %s1087
        %v1089 = vpop.permute.xlu0 %1088
        %s1091 = sor.u32 256, 56
        %1092 = vbcast.lane.b32.xlu0 %v1062, %s1091
        %v1093 = vpop.permute.xlu0 %1092
        %s1095 = sor.u32 256, 64
        %1096 = vbcast.lane.b32.xlu0 %v1062, %s1095
        %v1097 = vpop.permute.xlu0 %1096
        %s1099 = sor.u32 256, 72
        %1100 = vbcast.lane.b32.xlu0 %v1062, %s1099
        %v1101 = vpop.permute.xlu0 %1100
        %s1103 = sor.u32 256, 80
        %1104 = vbcast.lane.b32.xlu0 %v1062, %s1103
        %v1105 = vpop.permute.xlu0 %1104
        %s1107 = sor.u32 256, 88
        %1108 = vbcast.lane.b32.xlu0 %v1062, %s1107
        %v1109 = vpop.permute.xlu0 %1108
        %s1111 = sor.u32 256, 96
        %1112 = vbcast.lane.b32.xlu0 %v1062, %s1111
        %v1113 = vpop.permute.xlu0 %1112
        %s1115 = sor.u32 256, 104
        %1116 = vbcast.lane.b32.xlu0 %v1062, %s1115
        %v1117 = vpop.permute.xlu0 %1116
        %s1119 = sor.u32 256, 112
        %1120 = vbcast.lane.b32.xlu0 %v1062, %s1119
        %v1121 = vpop.permute.xlu0 %1120
        %s1123 = sor.u32 256, 120
        %1124 = vbcast.lane.b32.xlu0 %v1062, %s1123
        %v1125 = vpop.permute.xlu0 %1124
        %v1126 = vlaneseq
        %v1127 = vshrl.u32 %v1126, 7
        %v1128 = vsub.s32 4, %v1127
        %v1129 = vrot.slane %v317, %v1128
        %1131 = vbcast.lane.b32.xlu0 %v1129, 256
        %v1132 = vpop.permute.xlu0 %1131
        %s1134 = sor.u32 256, 8
        %1135 = vbcast.lane.b32.xlu0 %v1129, %s1134
        %v1136 = vpop.permute.xlu0 %1135
        %s1138 = sor.u32 256, 16
        %1139 = vbcast.lane.b32.xlu0 %v1129, %s1138
        %v1140 = vpop.permute.xlu0 %1139
        %s1142 = sor.u32 256, 24
        %1143 = vbcast.lane.b32.xlu0 %v1129, %s1142
        %v1144 = vpop.permute.xlu0 %1143
        %s1146 = sor.u32 256, 32
        %1147 = vbcast.lane.b32.xlu0 %v1129, %s1146
        %v1148 = vpop.permute.xlu0 %1147
        %s1150 = sor.u32 256, 40
        %1151 = vbcast.lane.b32.xlu0 %v1129, %s1150
        %v1152 = vpop.permute.xlu0 %1151
        %s1154 = sor.u32 256, 48
        %1155 = vbcast.lane.b32.xlu0 %v1129, %s1154
        %v1156 = vpop.permute.xlu0 %1155
        %s1158 = sor.u32 256, 56
        %1159 = vbcast.lane.b32.xlu0 %v1129, %s1158
        %v1160 = vpop.permute.xlu0 %1159
        %s1162 = sor.u32 256, 64
        %1163 = vbcast.lane.b32.xlu0 %v1129, %s1162
        %v1164 = vpop.permute.xlu0 %1163
        %s1166 = sor.u32 256, 72
        %1167 = vbcast.lane.b32.xlu0 %v1129, %s1166
        %v1168 = vpop.permute.xlu0 %1167
        %s1170 = sor.u32 256, 80
        %1171 = vbcast.lane.b32.xlu0 %v1129, %s1170
        %v1172 = vpop.permute.xlu0 %1171
        %s1174 = sor.u32 256, 88
        %1175 = vbcast.lane.b32.xlu0 %v1129, %s1174
        %v1176 = vpop.permute.xlu0 %1175
        %s1178 = sor.u32 256, 96
        %1179 = vbcast.lane.b32.xlu0 %v1129, %s1178
        %v1180 = vpop.permute.xlu0 %1179
        %s1182 = sor.u32 256, 104
        %1183 = vbcast.lane.b32.xlu0 %v1129, %s1182
        %v1184 = vpop.permute.xlu0 %1183
        %s1186 = sor.u32 256, 112
        %1187 = vbcast.lane.b32.xlu0 %v1129, %s1186
        %v1188 = vpop.permute.xlu0 %1187
        %s1190 = sor.u32 256, 120
        %1191 = vbcast.lane.b32.xlu0 %v1129, %s1190
        %v1192 = vpop.permute.xlu0 %1191
        %v1193 = vlaneseq
        %v1194 = vshrl.u32 %v1193, 7
        %v1195 = vsub.s32 5, %v1194
        %v1196 = vrot.slane %v317, %v1195
        %1198 = vbcast.lane.b32.xlu0 %v1196, 256
        %v1199 = vpop.permute.xlu0 %1198
        %s1201 = sor.u32 256, 8
        %1202 = vbcast.lane.b32.xlu0 %v1196, %s1201
        %v1203 = vpop.permute.xlu0 %1202
        %s1205 = sor.u32 256, 16
        %1206 = vbcast.lane.b32.xlu0 %v1196, %s1205
        %v1207 = vpop.permute.xlu0 %1206
        %s1209 = sor.u32 256, 24
        %1210 = vbcast.lane.b32.xlu0 %v1196, %s1209
        %v1211 = vpop.permute.xlu0 %1210
        %s1213 = sor.u32 256, 32
        %1214 = vbcast.lane.b32.xlu0 %v1196, %s1213
        %v1215 = vpop.permute.xlu0 %1214
        %s1217 = sor.u32 256, 40
        %1218 = vbcast.lane.b32.xlu0 %v1196, %s1217
        %v1219 = vpop.permute.xlu0 %1218
        %s1221 = sor.u32 256, 48
        %1222 = vbcast.lane.b32.xlu0 %v1196, %s1221
        %v1223 = vpop.permute.xlu0 %1222
        %s1225 = sor.u32 256, 56
        %1226 = vbcast.lane.b32.xlu0 %v1196, %s1225
        %v1227 = vpop.permute.xlu0 %1226
        %s1229 = sor.u32 256, 64
        %1230 = vbcast.lane.b32.xlu0 %v1196, %s1229
        %v1231 = vpop.permute.xlu0 %1230
        %s1233 = sor.u32 256, 72
        %1234 = vbcast.lane.b32.xlu0 %v1196, %s1233
        %v1235 = vpop.permute.xlu0 %1234
        %s1237 = sor.u32 256, 80
        %1238 = vbcast.lane.b32.xlu0 %v1196, %s1237
        %v1239 = vpop.permute.xlu0 %1238
        %s1241 = sor.u32 256, 88
        %1242 = vbcast.lane.b32.xlu0 %v1196, %s1241
        %v1243 = vpop.permute.xlu0 %1242
        %s1245 = sor.u32 256, 96
        %1246 = vbcast.lane.b32.xlu0 %v1196, %s1245
        %v1247 = vpop.permute.xlu0 %1246
        %s1249 = sor.u32 256, 104
        %1250 = vbcast.lane.b32.xlu0 %v1196, %s1249
        %v1251 = vpop.permute.xlu0 %1250
        %s1253 = sor.u32 256, 112
        %1254 = vbcast.lane.b32.xlu0 %v1196, %s1253
        %v1255 = vpop.permute.xlu0 %1254
        %s1257 = sor.u32 256, 120
        %1258 = vbcast.lane.b32.xlu0 %v1196, %s1257
        %v1259 = vpop.permute.xlu0 %1258
        %v1260 = vlaneseq
        %v1261 = vshrl.u32 %v1260, 7
        %v1262 = vsub.s32 6, %v1261
        %v1263 = vrot.slane %v317, %v1262
        %1265 = vbcast.lane.b32.xlu0 %v1263, 256
        %v1266 = vpop.permute.xlu0 %1265
        %s1268 = sor.u32 256, 8
        %1269 = vbcast.lane.b32.xlu0 %v1263, %s1268
        %v1270 = vpop.permute.xlu0 %1269
        %s1272 = sor.u32 256, 16
        %1273 = vbcast.lane.b32.xlu0 %v1263, %s1272
        %v1274 = vpop.permute.xlu0 %1273
        %s1276 = sor.u32 256, 24
        %1277 = vbcast.lane.b32.xlu0 %v1263, %s1276
        %v1278 = vpop.permute.xlu0 %1277
        %s1280 = sor.u32 256, 32
        %1281 = vbcast.lane.b32.xlu0 %v1263, %s1280
        %v1282 = vpop.permute.xlu0 %1281
        %s1284 = sor.u32 256, 40
        %1285 = vbcast.lane.b32.xlu0 %v1263, %s1284
        %v1286 = vpop.permute.xlu0 %1285
        %s1288 = sor.u32 256, 48
        %1289 = vbcast.lane.b32.xlu0 %v1263, %s1288
        %v1290 = vpop.permute.xlu0 %1289
        %s1292 = sor.u32 256, 56
        %1293 = vbcast.lane.b32.xlu0 %v1263, %s1292
        %v1294 = vpop.permute.xlu0 %1293
        %s1296 = sor.u32 256, 64
        %1297 = vbcast.lane.b32.xlu0 %v1263, %s1296
        %v1298 = vpop.permute.xlu0 %1297
        %s1300 = sor.u32 256, 72
        %1301 = vbcast.lane.b32.xlu0 %v1263, %s1300
        %v1302 = vpop.permute.xlu0 %1301
        %s1304 = sor.u32 256, 80
        %1305 = vbcast.lane.b32.xlu0 %v1263, %s1304
        %v1306 = vpop.permute.xlu0 %1305
        %s1308 = sor.u32 256, 88
        %1309 = vbcast.lane.b32.xlu0 %v1263, %s1308
        %v1310 = vpop.permute.xlu0 %1309
        %s1312 = sor.u32 256, 96
        %1313 = vbcast.lane.b32.xlu0 %v1263, %s1312
        %v1314 = vpop.permute.xlu0 %1313
        %s1316 = sor.u32 256, 104
        %1317 = vbcast.lane.b32.xlu0 %v1263, %s1316
        %v1318 = vpop.permute.xlu0 %1317
        %s1320 = sor.u32 256, 112
        %1321 = vbcast.lane.b32.xlu0 %v1263, %s1320
        %v1322 = vpop.permute.xlu0 %1321
        %s1324 = sor.u32 256, 120
        %1325 = vbcast.lane.b32.xlu0 %v1263, %s1324
        %v1326 = vpop.permute.xlu0 %1325
        %v1327 = vlaneseq
        %v1328 = vshrl.u32 %v1327, 7
        %v1329 = vsub.s32 7, %v1328
        %v1330 = vrot.slane %v317, %v1329
        %1332 = vbcast.lane.b32.xlu0 %v1330, 256
        %v1333 = vpop.permute.xlu0 %1332
        %s1335 = sor.u32 256, 8
        %1336 = vbcast.lane.b32.xlu0 %v1330, %s1335
        %v1337 = vpop.permute.xlu0 %1336
        %s1339 = sor.u32 256, 16
        %1340 = vbcast.lane.b32.xlu0 %v1330, %s1339
        %v1341 = vpop.permute.xlu0 %1340
        %s1343 = sor.u32 256, 24
        %1344 = vbcast.lane.b32.xlu0 %v1330, %s1343
        %v1345 = vpop.permute.xlu0 %1344
        %s1347 = sor.u32 256, 32
        %1348 = vbcast.lane.b32.xlu0 %v1330, %s1347
        %v1349 = vpop.permute.xlu0 %1348
        %s1351 = sor.u32 256, 40
        %1352 = vbcast.lane.b32.xlu0 %v1330, %s1351
        %v1353 = vpop.permute.xlu0 %1352
        %s1355 = sor.u32 256, 48
        %1356 = vbcast.lane.b32.xlu0 %v1330, %s1355
        %v1357 = vpop.permute.xlu0 %1356
        %s1359 = sor.u32 256, 56
        %1360 = vbcast.lane.b32.xlu0 %v1330, %s1359
        %v1361 = vpop.permute.xlu0 %1360
        %s1363 = sor.u32 256, 64
        %1364 = vbcast.lane.b32.xlu0 %v1330, %s1363
        %v1365 = vpop.permute.xlu0 %1364
        %s1367 = sor.u32 256, 72
        %1368 = vbcast.lane.b32.xlu0 %v1330, %s1367
        %v1369 = vpop.permute.xlu0 %1368
        %s1371 = sor.u32 256, 80
        %1372 = vbcast.lane.b32.xlu0 %v1330, %s1371
        %v1373 = vpop.permute.xlu0 %1372
        %s1375 = sor.u32 256, 88
        %1376 = vbcast.lane.b32.xlu0 %v1330, %s1375
        %v1377 = vpop.permute.xlu0 %1376
        %s1379 = sor.u32 256, 96
        %1380 = vbcast.lane.b32.xlu0 %v1330, %s1379
        %v1381 = vpop.permute.xlu0 %1380
        %s1383 = sor.u32 256, 104
        %1384 = vbcast.lane.b32.xlu0 %v1330, %s1383
        %v1385 = vpop.permute.xlu0 %1384
        %s1387 = sor.u32 256, 112
        %1388 = vbcast.lane.b32.xlu0 %v1330, %s1387
        %v1389 = vpop.permute.xlu0 %1388
        %s1391 = sor.u32 256, 120
        %1392 = vbcast.lane.b32.xlu0 %v1330, %s1391
        %v1393 = vpop.permute.xlu0 %1392
        %vm1394 = vcmp.eq.s32.totalorder %v328, %v321
        %vm1395 = vcmp.eq.s32.totalorder %v332, %v321
        %vm1396 = vcmp.eq.s32.totalorder %v336, %v321
        %vm1397 = vcmp.eq.s32.totalorder %v340, %v321
        %vm1398 = vcmp.eq.s32.totalorder %v344, %v321
        %vm1399 = vcmp.eq.s32.totalorder %v348, %v321
        %vm1400 = vcmp.eq.s32.totalorder %v352, %v321
        %vm1401 = vcmp.eq.s32.totalorder %v356, %v321
        %vm1402 = vcmp.eq.s32.totalorder %v360, %v321
        %vm1403 = vcmp.eq.s32.totalorder %v364, %v321
        %vm1404 = vcmp.eq.s32.totalorder %v368, %v321
        %vm1405 = vcmp.eq.s32.totalorder %v372, %v321
        %vm1406 = vcmp.eq.s32.totalorder %v376, %v321
        %vm1407 = vcmp.eq.s32.totalorder %v380, %v321
        %vm1408 = vcmp.eq.s32.totalorder %v384, %v321
        %vm1409 = vcmp.eq.s32.totalorder %v388, %v321
        %vm1410 = vcmp.eq.s32.totalorder %v395, %v321
        %vm1411 = vcmp.eq.s32.totalorder %v399, %v321
        %vm1412 = vcmp.eq.s32.totalorder %v403, %v321
        %vm1413 = vcmp.eq.s32.totalorder %v407, %v321
        %vm1414 = vcmp.eq.s32.totalorder %v411, %v321
        %vm1415 = vcmp.eq.s32.totalorder %v415, %v321
        %vm1416 = vcmp.eq.s32.totalorder %v419, %v321
        %vm1417 = vcmp.eq.s32.totalorder %v423, %v321
        %vm1418 = vcmp.eq.s32.totalorder %v427, %v321
        %vm1419 = vcmp.eq.s32.totalorder %v431, %v321
        %vm1420 = vcmp.eq.s32.totalorder %v435, %v321
        %vm1421 = vcmp.eq.s32.totalorder %v439, %v321
        %vm1422 = vcmp.eq.s32.totalorder %v443, %v321
        %vm1423 = vcmp.eq.s32.totalorder %v447, %v321
        %vm1424 = vcmp.eq.s32.totalorder %v451, %v321
        %vm1425 = vcmp.eq.s32.totalorder %v455, %v321
        %vm1426 = vcmp.eq.s32.totalorder %v462, %v321
        %vm1427 = vcmp.eq.s32.totalorder %v466, %v321
        %vm1428 = vcmp.eq.s32.totalorder %v470, %v321
        %vm1429 = vcmp.eq.s32.totalorder %v474, %v321
        %vm1430 = vcmp.eq.s32.totalorder %v478, %v321
        %vm1431 = vcmp.eq.s32.totalorder %v482, %v321
        %vm1432 = vcmp.eq.s32.totalorder %v486, %v321
        %vm1433 = vcmp.eq.s32.totalorder %v490, %v321
        %vm1434 = vcmp.eq.s32.totalorder %v494, %v321
        %vm1435 = vcmp.eq.s32.totalorder %v498, %v321
        %vm1436 = vcmp.eq.s32.totalorder %v502, %v321
        %vm1437 = vcmp.eq.s32.totalorder %v506, %v321
        %vm1438 = vcmp.eq.s32.totalorder %v510, %v321
        %vm1439 = vcmp.eq.s32.totalorder %v514, %v321
        %vm1440 = vcmp.eq.s32.totalorder %v518, %v321
        %vm1441 = vcmp.eq.s32.totalorder %v522, %v321
        %vm1442 = vcmp.eq.s32.totalorder %v529, %v321
        %vm1443 = vcmp.eq.s32.totalorder %v533, %v321
        %vm1444 = vcmp.eq.s32.totalorder %v537, %v321
        %vm1445 = vcmp.eq.s32.totalorder %v541, %v321
        %vm1446 = vcmp.eq.s32.totalorder %v545, %v321
        %vm1447 = vcmp.eq.s32.totalorder %v549, %v321
        %vm1448 = vcmp.eq.s32.totalorder %v553, %v321
        %vm1449 = vcmp.eq.s32.totalorder %v557, %v321
        %vm1450 = vcmp.eq.s32.totalorder %v561, %v321
        %vm1451 = vcmp.eq.s32.totalorder %v565, %v321
        %vm1452 = vcmp.eq.s32.totalorder %v569, %v321
        %vm1453 = vcmp.eq.s32.totalorder %v573, %v321
        %vm1454 = vcmp.eq.s32.totalorder %v577, %v321
        %vm1455 = vcmp.eq.s32.totalorder %v581, %v321
        %vm1456 = vcmp.eq.s32.totalorder %v585, %v321
        %vm1457 = vcmp.eq.s32.totalorder %v589, %v321
        %vm1458 = vcmp.eq.s32.totalorder %v596, %v321
        %vm1459 = vcmp.eq.s32.totalorder %v600, %v321
        %vm1460 = vcmp.eq.s32.totalorder %v604, %v321
        %vm1461 = vcmp.eq.s32.totalorder %v608, %v321
        %vm1462 = vcmp.eq.s32.totalorder %v612, %v321
        %vm1463 = vcmp.eq.s32.totalorder %v616, %v321
        %vm1464 = vcmp.eq.s32.totalorder %v620, %v321
        %vm1465 = vcmp.eq.s32.totalorder %v624, %v321
        %vm1466 = vcmp.eq.s32.totalorder %v628, %v321
        %vm1467 = vcmp.eq.s32.totalorder %v632, %v321
        %vm1468 = vcmp.eq.s32.totalorder %v636, %v321
        %vm1469 = vcmp.eq.s32.totalorder %v640, %v321
        %vm1470 = vcmp.eq.s32.totalorder %v644, %v321
        %vm1471 = vcmp.eq.s32.totalorder %v648, %v321
        %vm1472 = vcmp.eq.s32.totalorder %v652, %v321
        %vm1473 = vcmp.eq.s32.totalorder %v656, %v321
        %vm1474 = vcmp.eq.s32.totalorder %v663, %v321
        %vm1475 = vcmp.eq.s32.totalorder %v667, %v321
        %vm1476 = vcmp.eq.s32.totalorder %v671, %v321
        %vm1477 = vcmp.eq.s32.totalorder %v675, %v321
        %vm1478 = vcmp.eq.s32.totalorder %v679, %v321
        %vm1479 = vcmp.eq.s32.totalorder %v683, %v321
        %vm1480 = vcmp.eq.s32.totalorder %v687, %v321
        %vm1481 = vcmp.eq.s32.totalorder %v691, %v321
        %vm1482 = vcmp.eq.s32.totalorder %v695, %v321
        %vm1483 = vcmp.eq.s32.totalorder %v699, %v321
        %vm1484 = vcmp.eq.s32.totalorder %v703, %v321
        %vm1485 = vcmp.eq.s32.totalorder %v707, %v321
        %vm1486 = vcmp.eq.s32.totalorder %v711, %v321
        %vm1487 = vcmp.eq.s32.totalorder %v715, %v321
        %vm1488 = vcmp.eq.s32.totalorder %v719, %v321
        %vm1489 = vcmp.eq.s32.totalorder %v723, %v321
        %vm1490 = vcmp.eq.s32.totalorder %v730, %v321
        %vm1491 = vcmp.eq.s32.totalorder %v734, %v321
        %vm1492 = vcmp.eq.s32.totalorder %v738, %v321
        %vm1493 = vcmp.eq.s32.totalorder %v742, %v321
        %vm1494 = vcmp.eq.s32.totalorder %v746, %v321
        %vm1495 = vcmp.eq.s32.totalorder %v750, %v321
        %vm1496 = vcmp.eq.s32.totalorder %v754, %v321
        %vm1497 = vcmp.eq.s32.totalorder %v758, %v321
        %vm1498 = vcmp.eq.s32.totalorder %v762, %v321
        %vm1499 = vcmp.eq.s32.totalorder %v766, %v321
        %vm1500 = vcmp.eq.s32.totalorder %v770, %v321
        %vm1501 = vcmp.eq.s32.totalorder %v774, %v321
        %vm1502 = vcmp.eq.s32.totalorder %v778, %v321
        %vm1503 = vcmp.eq.s32.totalorder %v782, %v321
        %vm1504 = vcmp.eq.s32.totalorder %v786, %v321
        %vm1505 = vcmp.eq.s32.totalorder %v790, %v321
        %vm1506 = vcmp.eq.s32.totalorder %v797, %v321
        %vm1507 = vcmp.eq.s32.totalorder %v801, %v321
        %vm1508 = vcmp.eq.s32.totalorder %v805, %v321
        %vm1509 = vcmp.eq.s32.totalorder %v809, %v321
        %vm1510 = vcmp.eq.s32.totalorder %v813, %v321
        %vm1511 = vcmp.eq.s32.totalorder %v817, %v321
        %vm1512 = vcmp.eq.s32.totalorder %v821, %v321
        %vm1513 = vcmp.eq.s32.totalorder %v825, %v321
        %vm1514 = vcmp.eq.s32.totalorder %v829, %v321
        %vm1515 = vcmp.eq.s32.totalorder %v833, %v321
        %vm1516 = vcmp.eq.s32.totalorder %v837, %v321
        %vm1517 = vcmp.eq.s32.totalorder %v841, %v321
        %vm1518 = vcmp.eq.s32.totalorder %v845, %v321
        %vm1519 = vcmp.eq.s32.totalorder %v849, %v321
        %vm1520 = vcmp.eq.s32.totalorder %v853, %v321
        %vm1521 = vcmp.eq.s32.totalorder %v857, %v321
        %vm1522 = vcmp.eq.s32.totalorder %v864, %v321
        %vm1523 = vcmp.eq.s32.totalorder %v868, %v321
        %vm1524 = vcmp.eq.s32.totalorder %v872, %v321
        %vm1525 = vcmp.eq.s32.totalorder %v876, %v321
        %vm1526 = vcmp.eq.s32.totalorder %v880, %v321
        %vm1527 = vcmp.eq.s32.totalorder %v884, %v321
        %vm1528 = vcmp.eq.s32.totalorder %v888, %v321
        %vm1529 = vcmp.eq.s32.totalorder %v892, %v321
        %vm1530 = vcmp.eq.s32.totalorder %v896, %v321
        %vm1531 = vcmp.eq.s32.totalorder %v900, %v321
        %vm1532 = vcmp.eq.s32.totalorder %v904, %v321
        %vm1533 = vcmp.eq.s32.totalorder %v908, %v321
        %vm1534 = vcmp.eq.s32.totalorder %v912, %v321
        %vm1535 = vcmp.eq.s32.totalorder %v916, %v321
        %vm1536 = vcmp.eq.s32.totalorder %v920, %v321
        %vm1537 = vcmp.eq.s32.totalorder %v924, %v321
        %vm1538 = vcmp.eq.s32.totalorder %v931, %v321
        %vm1539 = vcmp.eq.s32.totalorder %v935, %v321
        %vm1540 = vcmp.eq.s32.totalorder %v939, %v321
        %vm1541 = vcmp.eq.s32.totalorder %v943, %v321
        %vm1542 = vcmp.eq.s32.totalorder %v947, %v321
        %vm1543 = vcmp.eq.s32.totalorder %v951, %v321
        %vm1544 = vcmp.eq.s32.totalorder %v955, %v321
        %vm1545 = vcmp.eq.s32.totalorder %v959, %v321
        %vm1546 = vcmp.eq.s32.totalorder %v963, %v321
        %vm1547 = vcmp.eq.s32.totalorder %v967, %v321
        %vm1548 = vcmp.eq.s32.totalorder %v971, %v321
        %vm1549 = vcmp.eq.s32.totalorder %v975, %v321
        %vm1550 = vcmp.eq.s32.totalorder %v979, %v321
        %vm1551 = vcmp.eq.s32.totalorder %v983, %v321
        %vm1552 = vcmp.eq.s32.totalorder %v987, %v321
        %vm1553 = vcmp.eq.s32.totalorder %v991, %v321
        %vm1554 = vcmp.eq.s32.totalorder %v998, %v321
        %vm1555 = vcmp.eq.s32.totalorder %v1002, %v321
        %vm1556 = vcmp.eq.s32.totalorder %v1006, %v321
        %vm1557 = vcmp.eq.s32.totalorder %v1010, %v321
        %vm1558 = vcmp.eq.s32.totalorder %v1014, %v321
        %vm1559 = vcmp.eq.s32.totalorder %v1018, %v321
        %vm1560 = vcmp.eq.s32.totalorder %v1022, %v321
        %vm1561 = vcmp.eq.s32.totalorder %v1026, %v321
        %vm1562 = vcmp.eq.s32.totalorder %v1030, %v321
        %vm1563 = vcmp.eq.s32.totalorder %v1034, %v321
        %vm1564 = vcmp.eq.s32.totalorder %v1038, %v321
        %vm1565 = vcmp.eq.s32.totalorder %v1042, %v321
        %vm1566 = vcmp.eq.s32.totalorder %v1046, %v321
        %vm1567 = vcmp.eq.s32.totalorder %v1050, %v321
        %vm1568 = vcmp.eq.s32.totalorder %v1054, %v321
        %vm1569 = vcmp.eq.s32.totalorder %v1058, %v321
        %vm1570 = vcmp.eq.s32.totalorder %v1065, %v321
        %vm1571 = vcmp.eq.s32.totalorder %v1069, %v321
        %vm1572 = vcmp.eq.s32.totalorder %v1073, %v321
        %vm1573 = vcmp.eq.s32.totalorder %v1077, %v321
        %vm1574 = vcmp.eq.s32.totalorder %v1081, %v321
        %vm1575 = vcmp.eq.s32.totalorder %v1085, %v321
        %vm1576 = vcmp.eq.s32.totalorder %v1089, %v321
        %vm1577 = vcmp.eq.s32.totalorder %v1093, %v321
        %vm1578 = vcmp.eq.s32.totalorder %v1097, %v321
        %vm1579 = vcmp.eq.s32.totalorder %v1101, %v321
        %vm1580 = vcmp.eq.s32.totalorder %v1105, %v321
        %vm1581 = vcmp.eq.s32.totalorder %v1109, %v321
        %vm1582 = vcmp.eq.s32.totalorder %v1113, %v321
        %vm1583 = vcmp.eq.s32.totalorder %v1117, %v321
        %vm1584 = vcmp.eq.s32.totalorder %v1121, %v321
        %vm1585 = vcmp.eq.s32.totalorder %v1125, %v321
        %vm1586 = vcmp.eq.s32.totalorder %v1132, %v321
        %vm1587 = vcmp.eq.s32.totalorder %v1136, %v321
        %vm1588 = vcmp.eq.s32.totalorder %v1140, %v321
        %vm1589 = vcmp.eq.s32.totalorder %v1144, %v321
        %vm1590 = vcmp.eq.s32.totalorder %v1148, %v321
        %vm1591 = vcmp.eq.s32.totalorder %v1152, %v321
        %vm1592 = vcmp.eq.s32.totalorder %v1156, %v321
        %vm1593 = vcmp.eq.s32.totalorder %v1160, %v321
        %vm1594 = vcmp.eq.s32.totalorder %v1164, %v321
        %vm1595 = vcmp.eq.s32.totalorder %v1168, %v321
        %vm1596 = vcmp.eq.s32.totalorder %v1172, %v321
        %vm1597 = vcmp.eq.s32.totalorder %v1176, %v321
        %vm1598 = vcmp.eq.s32.totalorder %v1180, %v321
        %vm1599 = vcmp.eq.s32.totalorder %v1184, %v321
        %vm1600 = vcmp.eq.s32.totalorder %v1188, %v321
        %vm1601 = vcmp.eq.s32.totalorder %v1192, %v321
        %vm1602 = vcmp.eq.s32.totalorder %v1199, %v321
        %vm1603 = vcmp.eq.s32.totalorder %v1203, %v321
        %vm1604 = vcmp.eq.s32.totalorder %v1207, %v321
        %vm1605 = vcmp.eq.s32.totalorder %v1211, %v321
        %vm1606 = vcmp.eq.s32.totalorder %v1215, %v321
        %vm1607 = vcmp.eq.s32.totalorder %v1219, %v321
        %vm1608 = vcmp.eq.s32.totalorder %v1223, %v321
        %vm1609 = vcmp.eq.s32.totalorder %v1227, %v321
        %vm1610 = vcmp.eq.s32.totalorder %v1231, %v321
        %vm1611 = vcmp.eq.s32.totalorder %v1235, %v321
        %vm1612 = vcmp.eq.s32.totalorder %v1239, %v321
        %vm1613 = vcmp.eq.s32.totalorder %v1243, %v321
        %vm1614 = vcmp.eq.s32.totalorder %v1247, %v321
        %vm1615 = vcmp.eq.s32.totalorder %v1251, %v321
        %vm1616 = vcmp.eq.s32.totalorder %v1255, %v321
        %vm1617 = vcmp.eq.s32.totalorder %v1259, %v321
        %vm1618 = vcmp.eq.s32.totalorder %v1266, %v321
        %vm1619 = vcmp.eq.s32.totalorder %v1270, %v321
        %vm1620 = vcmp.eq.s32.totalorder %v1274, %v321
        %vm1621 = vcmp.eq.s32.totalorder %v1278, %v321
        %vm1622 = vcmp.eq.s32.totalorder %v1282, %v321
        %vm1623 = vcmp.eq.s32.totalorder %v1286, %v321
        %vm1624 = vcmp.eq.s32.totalorder %v1290, %v321
        %vm1625 = vcmp.eq.s32.totalorder %v1294, %v321
        %vm1626 = vcmp.eq.s32.totalorder %v1298, %v321
        %vm1627 = vcmp.eq.s32.totalorder %v1302, %v321
        %vm1628 = vcmp.eq.s32.totalorder %v1306, %v321
        %vm1629 = vcmp.eq.s32.totalorder %v1310, %v321
        %vm1630 = vcmp.eq.s32.totalorder %v1314, %v321
        %vm1631 = vcmp.eq.s32.totalorder %v1318, %v321
        %vm1632 = vcmp.eq.s32.totalorder %v1322, %v321
        %vm1633 = vcmp.eq.s32.totalorder %v1326, %v321
        %vm1634 = vcmp.eq.s32.totalorder %v1333, %v321
        %vm1635 = vcmp.eq.s32.totalorder %v1337, %v321
        %vm1636 = vcmp.eq.s32.totalorder %v1341, %v321
        %vm1637 = vcmp.eq.s32.totalorder %v1345, %v321
        %vm1638 = vcmp.eq.s32.totalorder %v1349, %v321
        %vm1639 = vcmp.eq.s32.totalorder %v1353, %v321
        %vm1640 = vcmp.eq.s32.totalorder %v1357, %v321
        %vm1641 = vcmp.eq.s32.totalorder %v1361, %v321
        %vm1642 = vcmp.eq.s32.totalorder %v1365, %v321
        %vm1643 = vcmp.eq.s32.totalorder %v1369, %v321
        %vm1644 = vcmp.eq.s32.totalorder %v1373, %v321
        %vm1645 = vcmp.eq.s32.totalorder %v1377, %v321
        %vm1646 = vcmp.eq.s32.totalorder %v1381, %v321
        %vm1647 = vcmp.eq.s32.totalorder %v1385, %v321
        %vm1648 = vcmp.eq.s32.totalorder %v1389, %v321
        %vm1649 = vcmp.eq.s32.totalorder %v1393, %v321
        %v1650 = vlaneseq
        %v1651 = vshrl.u32 %v1650, 7
        %v1652 = vsub.s32 0, %v1651
        %v1653 = vrot.slane %v318, %v1652
        %1655 = vbcast.lane.b32.xlu0 %v1653, 256
        %v1656 = vpop.permute.xlu0 %1655
        %s1658 = sor.u32 256, 8
        %1659 = vbcast.lane.b32.xlu0 %v1653, %s1658
        %v1660 = vpop.permute.xlu0 %1659
        %s1662 = sor.u32 256, 16
        %1663 = vbcast.lane.b32.xlu0 %v1653, %s1662
        %v1664 = vpop.permute.xlu0 %1663
        %s1666 = sor.u32 256, 24
        %1667 = vbcast.lane.b32.xlu0 %v1653, %s1666
        %v1668 = vpop.permute.xlu0 %1667
        %s1670 = sor.u32 256, 32
        %1671 = vbcast.lane.b32.xlu0 %v1653, %s1670
        %v1672 = vpop.permute.xlu0 %1671
        %s1674 = sor.u32 256, 40
        %1675 = vbcast.lane.b32.xlu0 %v1653, %s1674
        %v1676 = vpop.permute.xlu0 %1675
        %s1678 = sor.u32 256, 48
        %1679 = vbcast.lane.b32.xlu0 %v1653, %s1678
        %v1680 = vpop.permute.xlu0 %1679
        %s1682 = sor.u32 256, 56
        %1683 = vbcast.lane.b32.xlu0 %v1653, %s1682
        %v1684 = vpop.permute.xlu0 %1683
        %s1686 = sor.u32 256, 64
        %1687 = vbcast.lane.b32.xlu0 %v1653, %s1686
        %v1688 = vpop.permute.xlu0 %1687
        %s1690 = sor.u32 256, 72
        %1691 = vbcast.lane.b32.xlu0 %v1653, %s1690
        %v1692 = vpop.permute.xlu0 %1691
        %s1694 = sor.u32 256, 80
        %1695 = vbcast.lane.b32.xlu0 %v1653, %s1694
        %v1696 = vpop.permute.xlu0 %1695
        %s1698 = sor.u32 256, 88
        %1699 = vbcast.lane.b32.xlu0 %v1653, %s1698
        %v1700 = vpop.permute.xlu0 %1699
        %s1702 = sor.u32 256, 96
        %1703 = vbcast.lane.b32.xlu0 %v1653, %s1702
        %v1704 = vpop.permute.xlu0 %1703
        %s1706 = sor.u32 256, 104
        %1707 = vbcast.lane.b32.xlu0 %v1653, %s1706
        %v1708 = vpop.permute.xlu0 %1707
        %s1710 = sor.u32 256, 112
        %1711 = vbcast.lane.b32.xlu0 %v1653, %s1710
        %v1712 = vpop.permute.xlu0 %1711
        %s1714 = sor.u32 256, 120
        %1715 = vbcast.lane.b32.xlu0 %v1653, %s1714
        %v1716 = vpop.permute.xlu0 %1715
        %v1717 = vlaneseq
        %v1718 = vshrl.u32 %v1717, 7
        %v1719 = vsub.s32 1, %v1718
        %v1720 = vrot.slane %v318, %v1719
        %1722 = vbcast.lane.b32.xlu0 %v1720, 256
        %v1723 = vpop.permute.xlu0 %1722
        %s1725 = sor.u32 256, 8
        %1726 = vbcast.lane.b32.xlu0 %v1720, %s1725
        %v1727 = vpop.permute.xlu0 %1726
        %s1729 = sor.u32 256, 16
        %1730 = vbcast.lane.b32.xlu0 %v1720, %s1729
        %v1731 = vpop.permute.xlu0 %1730
        %s1733 = sor.u32 256, 24
        %1734 = vbcast.lane.b32.xlu0 %v1720, %s1733
        %v1735 = vpop.permute.xlu0 %1734
        %s1737 = sor.u32 256, 32
        %1738 = vbcast.lane.b32.xlu0 %v1720, %s1737
        %v1739 = vpop.permute.xlu0 %1738
        %s1741 = sor.u32 256, 40
        %1742 = vbcast.lane.b32.xlu0 %v1720, %s1741
        %v1743 = vpop.permute.xlu0 %1742
        %s1745 = sor.u32 256, 48
        %1746 = vbcast.lane.b32.xlu0 %v1720, %s1745
        %v1747 = vpop.permute.xlu0 %1746
        %s1749 = sor.u32 256, 56
        %1750 = vbcast.lane.b32.xlu0 %v1720, %s1749
        %v1751 = vpop.permute.xlu0 %1750
        %s1753 = sor.u32 256, 64
        %1754 = vbcast.lane.b32.xlu0 %v1720, %s1753
        %v1755 = vpop.permute.xlu0 %1754
        %s1757 = sor.u32 256, 72
        %1758 = vbcast.lane.b32.xlu0 %v1720, %s1757
        %v1759 = vpop.permute.xlu0 %1758
        %s1761 = sor.u32 256, 80
        %1762 = vbcast.lane.b32.xlu0 %v1720, %s1761
        %v1763 = vpop.permute.xlu0 %1762
        %s1765 = sor.u32 256, 88
        %1766 = vbcast.lane.b32.xlu0 %v1720, %s1765
        %v1767 = vpop.permute.xlu0 %1766
        %s1769 = sor.u32 256, 96
        %1770 = vbcast.lane.b32.xlu0 %v1720, %s1769
        %v1771 = vpop.permute.xlu0 %1770
        %s1773 = sor.u32 256, 104
        %1774 = vbcast.lane.b32.xlu0 %v1720, %s1773
        %v1775 = vpop.permute.xlu0 %1774
        %s1777 = sor.u32 256, 112
        %1778 = vbcast.lane.b32.xlu0 %v1720, %s1777
        %v1779 = vpop.permute.xlu0 %1778
        %s1781 = sor.u32 256, 120
        %1782 = vbcast.lane.b32.xlu0 %v1720, %s1781
        %v1783 = vpop.permute.xlu0 %1782
        %v1784 = vlaneseq
        %v1785 = vshrl.u32 %v1784, 7
        %v1786 = vsub.s32 2, %v1785
        %v1787 = vrot.slane %v318, %v1786
        %1789 = vbcast.lane.b32.xlu0 %v1787, 256
        %v1790 = vpop.permute.xlu0 %1789
        %s1792 = sor.u32 256, 8
        %1793 = vbcast.lane.b32.xlu0 %v1787, %s1792
        %v1794 = vpop.permute.xlu0 %1793
        %s1796 = sor.u32 256, 16
        %1797 = vbcast.lane.b32.xlu0 %v1787, %s1796
        %v1798 = vpop.permute.xlu0 %1797
        %s1800 = sor.u32 256, 24
        %1801 = vbcast.lane.b32.xlu0 %v1787, %s1800
        %v1802 = vpop.permute.xlu0 %1801
        %s1804 = sor.u32 256, 32
        %1805 = vbcast.lane.b32.xlu0 %v1787, %s1804
        %v1806 = vpop.permute.xlu0 %1805
        %s1808 = sor.u32 256, 40
        %1809 = vbcast.lane.b32.xlu0 %v1787, %s1808
        %v1810 = vpop.permute.xlu0 %1809
        %s1812 = sor.u32 256, 48
        %1813 = vbcast.lane.b32.xlu0 %v1787, %s1812
        %v1814 = vpop.permute.xlu0 %1813
        %s1816 = sor.u32 256, 56
        %1817 = vbcast.lane.b32.xlu0 %v1787, %s1816
        %v1818 = vpop.permute.xlu0 %1817
        %s1820 = sor.u32 256, 64
        %1821 = vbcast.lane.b32.xlu0 %v1787, %s1820
        %v1822 = vpop.permute.xlu0 %1821
        %s1824 = sor.u32 256, 72
        %1825 = vbcast.lane.b32.xlu0 %v1787, %s1824
        %v1826 = vpop.permute.xlu0 %1825
        %s1828 = sor.u32 256, 80
        %1829 = vbcast.lane.b32.xlu0 %v1787, %s1828
        %v1830 = vpop.permute.xlu0 %1829
        %s1832 = sor.u32 256, 88
        %1833 = vbcast.lane.b32.xlu0 %v1787, %s1832
        %v1834 = vpop.permute.xlu0 %1833
        %s1836 = sor.u32 256, 96
        %1837 = vbcast.lane.b32.xlu0 %v1787, %s1836
        %v1838 = vpop.permute.xlu0 %1837
        %s1840 = sor.u32 256, 104
        %1841 = vbcast.lane.b32.xlu0 %v1787, %s1840
        %v1842 = vpop.permute.xlu0 %1841
        %s1844 = sor.u32 256, 112
        %1845 = vbcast.lane.b32.xlu0 %v1787, %s1844
        %v1846 = vpop.permute.xlu0 %1845
        %s1848 = sor.u32 256, 120
        %1849 = vbcast.lane.b32.xlu0 %v1787, %s1848
        %v1850 = vpop.permute.xlu0 %1849
        %v1851 = vlaneseq
        %v1852 = vshrl.u32 %v1851, 7
        %v1853 = vsub.s32 3, %v1852
        %v1854 = vrot.slane %v318, %v1853
        %1856 = vbcast.lane.b32.xlu0 %v1854, 256
        %v1857 = vpop.permute.xlu0 %1856
        %s1859 = sor.u32 256, 8
        %1860 = vbcast.lane.b32.xlu0 %v1854, %s1859
        %v1861 = vpop.permute.xlu0 %1860
        %s1863 = sor.u32 256, 16
        %1864 = vbcast.lane.b32.xlu0 %v1854, %s1863
        %v1865 = vpop.permute.xlu0 %1864
        %s1867 = sor.u32 256, 24
        %1868 = vbcast.lane.b32.xlu0 %v1854, %s1867
        %v1869 = vpop.permute.xlu0 %1868
        %s1871 = sor.u32 256, 32
        %1872 = vbcast.lane.b32.xlu0 %v1854, %s1871
        %v1873 = vpop.permute.xlu0 %1872
        %s1875 = sor.u32 256, 40
        %1876 = vbcast.lane.b32.xlu0 %v1854, %s1875
        %v1877 = vpop.permute.xlu0 %1876
        %s1879 = sor.u32 256, 48
        %1880 = vbcast.lane.b32.xlu0 %v1854, %s1879
        %v1881 = vpop.permute.xlu0 %1880
        %s1883 = sor.u32 256, 56
        %1884 = vbcast.lane.b32.xlu0 %v1854, %s1883
        %v1885 = vpop.permute.xlu0 %1884
        %s1887 = sor.u32 256, 64
        %1888 = vbcast.lane.b32.xlu0 %v1854, %s1887
        %v1889 = vpop.permute.xlu0 %1888
        %s1891 = sor.u32 256, 72
        %1892 = vbcast.lane.b32.xlu0 %v1854, %s1891
        %v1893 = vpop.permute.xlu0 %1892
        %s1895 = sor.u32 256, 80
        %1896 = vbcast.lane.b32.xlu0 %v1854, %s1895
        %v1897 = vpop.permute.xlu0 %1896
        %s1899 = sor.u32 256, 88
        %1900 = vbcast.lane.b32.xlu0 %v1854, %s1899
        %v1901 = vpop.permute.xlu0 %1900
        %s1903 = sor.u32 256, 96
        %1904 = vbcast.lane.b32.xlu0 %v1854, %s1903
        %v1905 = vpop.permute.xlu0 %1904
        %s1907 = sor.u32 256, 104
        %1908 = vbcast.lane.b32.xlu0 %v1854, %s1907
        %v1909 = vpop.permute.xlu0 %1908
        %s1911 = sor.u32 256, 112
        %1912 = vbcast.lane.b32.xlu0 %v1854, %s1911
        %v1913 = vpop.permute.xlu0 %1912
        %s1915 = sor.u32 256, 120
        %1916 = vbcast.lane.b32.xlu0 %v1854, %s1915
        %v1917 = vpop.permute.xlu0 %1916
        %v1918 = vlaneseq
        %v1919 = vshrl.u32 %v1918, 7
        %v1920 = vsub.s32 4, %v1919
        %v1921 = vrot.slane %v318, %v1920
        %1923 = vbcast.lane.b32.xlu0 %v1921, 256
        %v1924 = vpop.permute.xlu0 %1923
        %s1926 = sor.u32 256, 8
        %1927 = vbcast.lane.b32.xlu0 %v1921, %s1926
        %v1928 = vpop.permute.xlu0 %1927
        %s1930 = sor.u32 256, 16
        %1931 = vbcast.lane.b32.xlu0 %v1921, %s1930
        %v1932 = vpop.permute.xlu0 %1931
        %s1934 = sor.u32 256, 24
        %1935 = vbcast.lane.b32.xlu0 %v1921, %s1934
        %v1936 = vpop.permute.xlu0 %1935
        %s1938 = sor.u32 256, 32
        %1939 = vbcast.lane.b32.xlu0 %v1921, %s1938
        %v1940 = vpop.permute.xlu0 %1939
        %s1942 = sor.u32 256, 40
        %1943 = vbcast.lane.b32.xlu0 %v1921, %s1942
        %v1944 = vpop.permute.xlu0 %1943
        %s1946 = sor.u32 256, 48
        %1947 = vbcast.lane.b32.xlu0 %v1921, %s1946
        %v1948 = vpop.permute.xlu0 %1947
        %s1950 = sor.u32 256, 56
        %1951 = vbcast.lane.b32.xlu0 %v1921, %s1950
        %v1952 = vpop.permute.xlu0 %1951
        %s1954 = sor.u32 256, 64
        %1955 = vbcast.lane.b32.xlu0 %v1921, %s1954
        %v1956 = vpop.permute.xlu0 %1955
        %s1958 = sor.u32 256, 72
        %1959 = vbcast.lane.b32.xlu0 %v1921, %s1958
        %v1960 = vpop.permute.xlu0 %1959
        %s1962 = sor.u32 256, 80
        %1963 = vbcast.lane.b32.xlu0 %v1921, %s1962
        %v1964 = vpop.permute.xlu0 %1963
        %s1966 = sor.u32 256, 88
        %1967 = vbcast.lane.b32.xlu0 %v1921, %s1966
        %v1968 = vpop.permute.xlu0 %1967
        %s1970 = sor.u32 256, 96
        %1971 = vbcast.lane.b32.xlu0 %v1921, %s1970
        %v1972 = vpop.permute.xlu0 %1971
        %s1974 = sor.u32 256, 104
        %1975 = vbcast.lane.b32.xlu0 %v1921, %s1974
        %v1976 = vpop.permute.xlu0 %1975
        %s1978 = sor.u32 256, 112
        %1979 = vbcast.lane.b32.xlu0 %v1921, %s1978
        %v1980 = vpop.permute.xlu0 %1979
        %s1982 = sor.u32 256, 120
        %1983 = vbcast.lane.b32.xlu0 %v1921, %s1982
        %v1984 = vpop.permute.xlu0 %1983
        %v1985 = vlaneseq
        %v1986 = vshrl.u32 %v1985, 7
        %v1987 = vsub.s32 5, %v1986
        %v1988 = vrot.slane %v318, %v1987
        %1990 = vbcast.lane.b32.xlu0 %v1988, 256
        %v1991 = vpop.permute.xlu0 %1990
        %s1993 = sor.u32 256, 8
        %1994 = vbcast.lane.b32.xlu0 %v1988, %s1993
        %v1995 = vpop.permute.xlu0 %1994
        %s1997 = sor.u32 256, 16
        %1998 = vbcast.lane.b32.xlu0 %v1988, %s1997
        %v1999 = vpop.permute.xlu0 %1998
        %s2001 = sor.u32 256, 24
        %2002 = vbcast.lane.b32.xlu0 %v1988, %s2001
        %v2003 = vpop.permute.xlu0 %2002
        %s2005 = sor.u32 256, 32
        %2006 = vbcast.lane.b32.xlu0 %v1988, %s2005
        %v2007 = vpop.permute.xlu0 %2006
        %s2009 = sor.u32 256, 40
        %2010 = vbcast.lane.b32.xlu0 %v1988, %s2009
        %v2011 = vpop.permute.xlu0 %2010
        %s2013 = sor.u32 256, 48
        %2014 = vbcast.lane.b32.xlu0 %v1988, %s2013
        %v2015 = vpop.permute.xlu0 %2014
        %s2017 = sor.u32 256, 56
        %2018 = vbcast.lane.b32.xlu0 %v1988, %s2017
        %v2019 = vpop.permute.xlu0 %2018
        %s2021 = sor.u32 256, 64
        %2022 = vbcast.lane.b32.xlu0 %v1988, %s2021
        %v2023 = vpop.permute.xlu0 %2022
        %s2025 = sor.u32 256, 72
        %2026 = vbcast.lane.b32.xlu0 %v1988, %s2025
        %v2027 = vpop.permute.xlu0 %2026
        %s2029 = sor.u32 256, 80
        %2030 = vbcast.lane.b32.xlu0 %v1988, %s2029
        %v2031 = vpop.permute.xlu0 %2030
        %s2033 = sor.u32 256, 88
        %2034 = vbcast.lane.b32.xlu0 %v1988, %s2033
        %v2035 = vpop.permute.xlu0 %2034
        %s2037 = sor.u32 256, 96
        %2038 = vbcast.lane.b32.xlu0 %v1988, %s2037
        %v2039 = vpop.permute.xlu0 %2038
        %s2041 = sor.u32 256, 104
        %2042 = vbcast.lane.b32.xlu0 %v1988, %s2041
        %v2043 = vpop.permute.xlu0 %2042
        %s2045 = sor.u32 256, 112
        %2046 = vbcast.lane.b32.xlu0 %v1988, %s2045
        %v2047 = vpop.permute.xlu0 %2046
        %s2049 = sor.u32 256, 120
        %2050 = vbcast.lane.b32.xlu0 %v1988, %s2049
        %v2051 = vpop.permute.xlu0 %2050
        %v2052 = vlaneseq
        %v2053 = vshrl.u32 %v2052, 7
        %v2054 = vsub.s32 6, %v2053
        %v2055 = vrot.slane %v318, %v2054
        %2057 = vbcast.lane.b32.xlu0 %v2055, 256
        %v2058 = vpop.permute.xlu0 %2057
        %s2060 = sor.u32 256, 8
        %2061 = vbcast.lane.b32.xlu0 %v2055, %s2060
        %v2062 = vpop.permute.xlu0 %2061
        %s2064 = sor.u32 256, 16
        %2065 = vbcast.lane.b32.xlu0 %v2055, %s2064
        %v2066 = vpop.permute.xlu0 %2065
        %s2068 = sor.u32 256, 24
        %2069 = vbcast.lane.b32.xlu0 %v2055, %s2068
        %v2070 = vpop.permute.xlu0 %2069
        %s2072 = sor.u32 256, 32
        %2073 = vbcast.lane.b32.xlu0 %v2055, %s2072
        %v2074 = vpop.permute.xlu0 %2073
        %s2076 = sor.u32 256, 40
        %2077 = vbcast.lane.b32.xlu0 %v2055, %s2076
        %v2078 = vpop.permute.xlu0 %2077
        %s2080 = sor.u32 256, 48
        %2081 = vbcast.lane.b32.xlu0 %v2055, %s2080
        %v2082 = vpop.permute.xlu0 %2081
        %s2084 = sor.u32 256, 56
        %2085 = vbcast.lane.b32.xlu0 %v2055, %s2084
        %v2086 = vpop.permute.xlu0 %2085
        %s2088 = sor.u32 256, 64
        %2089 = vbcast.lane.b32.xlu0 %v2055, %s2088
        %v2090 = vpop.permute.xlu0 %2089
        %s2092 = sor.u32 256, 72
        %2093 = vbcast.lane.b32.xlu0 %v2055, %s2092
        %v2094 = vpop.permute.xlu0 %2093
        %s2096 = sor.u32 256, 80
        %2097 = vbcast.lane.b32.xlu0 %v2055, %s2096
        %v2098 = vpop.permute.xlu0 %2097
        %s2100 = sor.u32 256, 88
        %2101 = vbcast.lane.b32.xlu0 %v2055, %s2100
        %v2102 = vpop.permute.xlu0 %2101
        %s2104 = sor.u32 256, 96
        %2105 = vbcast.lane.b32.xlu0 %v2055, %s2104
        %v2106 = vpop.permute.xlu0 %2105
        %s2108 = sor.u32 256, 104
        %2109 = vbcast.lane.b32.xlu0 %v2055, %s2108
        %v2110 = vpop.permute.xlu0 %2109
        %s2112 = sor.u32 256, 112
        %2113 = vbcast.lane.b32.xlu0 %v2055, %s2112
        %v2114 = vpop.permute.xlu0 %2113
        %s2116 = sor.u32 256, 120
        %2117 = vbcast.lane.b32.xlu0 %v2055, %s2116
        %v2118 = vpop.permute.xlu0 %2117
        %v2119 = vlaneseq
        %v2120 = vshrl.u32 %v2119, 7
        %v2121 = vsub.s32 7, %v2120
        %v2122 = vrot.slane %v318, %v2121
        %2124 = vbcast.lane.b32.xlu0 %v2122, 256
        %v2125 = vpop.permute.xlu0 %2124
        %s2127 = sor.u32 256, 8
        %2128 = vbcast.lane.b32.xlu0 %v2122, %s2127
        %v2129 = vpop.permute.xlu0 %2128
        %s2131 = sor.u32 256, 16
        %2132 = vbcast.lane.b32.xlu0 %v2122, %s2131
        %v2133 = vpop.permute.xlu0 %2132
        %s2135 = sor.u32 256, 24
        %2136 = vbcast.lane.b32.xlu0 %v2122, %s2135
        %v2137 = vpop.permute.xlu0 %2136
        %s2139 = sor.u32 256, 32
        %2140 = vbcast.lane.b32.xlu0 %v2122, %s2139
        %v2141 = vpop.permute.xlu0 %2140
        %s2143 = sor.u32 256, 40
        %2144 = vbcast.lane.b32.xlu0 %v2122, %s2143
        %v2145 = vpop.permute.xlu0 %2144
        %s2147 = sor.u32 256, 48
        %2148 = vbcast.lane.b32.xlu0 %v2122, %s2147
        %v2149 = vpop.permute.xlu0 %2148
        %s2151 = sor.u32 256, 56
        %2152 = vbcast.lane.b32.xlu0 %v2122, %s2151
        %v2153 = vpop.permute.xlu0 %2152
        %s2155 = sor.u32 256, 64
        %2156 = vbcast.lane.b32.xlu0 %v2122, %s2155
        %v2157 = vpop.permute.xlu0 %2156
        %s2159 = sor.u32 256, 72
        %2160 = vbcast.lane.b32.xlu0 %v2122, %s2159
        %v2161 = vpop.permute.xlu0 %2160
        %s2163 = sor.u32 256, 80
        %2164 = vbcast.lane.b32.xlu0 %v2122, %s2163
        %v2165 = vpop.permute.xlu0 %2164
        %s2167 = sor.u32 256, 88
        %2168 = vbcast.lane.b32.xlu0 %v2122, %s2167
        %v2169 = vpop.permute.xlu0 %2168
        %s2171 = sor.u32 256, 96
        %2172 = vbcast.lane.b32.xlu0 %v2122, %s2171
        %v2173 = vpop.permute.xlu0 %2172
        %s2175 = sor.u32 256, 104
        %2176 = vbcast.lane.b32.xlu0 %v2122, %s2175
        %v2177 = vpop.permute.xlu0 %2176
        %s2179 = sor.u32 256, 112
        %2180 = vbcast.lane.b32.xlu0 %v2122, %s2179
        %v2181 = vpop.permute.xlu0 %2180
        %s2183 = sor.u32 256, 120
        %2184 = vbcast.lane.b32.xlu0 %v2122, %s2183
        %v2185 = vpop.permute.xlu0 %2184
        %v2186 = vlaneseq
        %v2187 = vshrl.u32 %v2186, 7
        %v2188 = vsub.s32 0, %v2187
        %v2189 = vrot.slane %v319, %v2188
        %2191 = vbcast.lane.b32.xlu0 %v2189, 256
        %v2192 = vpop.permute.xlu0 %2191
        %s2194 = sor.u32 256, 8
        %2195 = vbcast.lane.b32.xlu0 %v2189, %s2194
        %v2196 = vpop.permute.xlu0 %2195
        %s2198 = sor.u32 256, 16
        %2199 = vbcast.lane.b32.xlu0 %v2189, %s2198
        %v2200 = vpop.permute.xlu0 %2199
        %s2202 = sor.u32 256, 24
        %2203 = vbcast.lane.b32.xlu0 %v2189, %s2202
        %v2204 = vpop.permute.xlu0 %2203
        %s2206 = sor.u32 256, 32
        %2207 = vbcast.lane.b32.xlu0 %v2189, %s2206
        %v2208 = vpop.permute.xlu0 %2207
        %s2210 = sor.u32 256, 40
        %2211 = vbcast.lane.b32.xlu0 %v2189, %s2210
        %v2212 = vpop.permute.xlu0 %2211
        %s2214 = sor.u32 256, 48
        %2215 = vbcast.lane.b32.xlu0 %v2189, %s2214
        %v2216 = vpop.permute.xlu0 %2215
        %s2218 = sor.u32 256, 56
        %2219 = vbcast.lane.b32.xlu0 %v2189, %s2218
        %v2220 = vpop.permute.xlu0 %2219
        %s2222 = sor.u32 256, 64
        %2223 = vbcast.lane.b32.xlu0 %v2189, %s2222
        %v2224 = vpop.permute.xlu0 %2223
        %s2226 = sor.u32 256, 72
        %2227 = vbcast.lane.b32.xlu0 %v2189, %s2226
        %v2228 = vpop.permute.xlu0 %2227
        %s2230 = sor.u32 256, 80
        %2231 = vbcast.lane.b32.xlu0 %v2189, %s2230
        %v2232 = vpop.permute.xlu0 %2231
        %s2234 = sor.u32 256, 88
        %2235 = vbcast.lane.b32.xlu0 %v2189, %s2234
        %v2236 = vpop.permute.xlu0 %2235
        %s2238 = sor.u32 256, 96
        %2239 = vbcast.lane.b32.xlu0 %v2189, %s2238
        %v2240 = vpop.permute.xlu0 %2239
        %s2242 = sor.u32 256, 104
        %2243 = vbcast.lane.b32.xlu0 %v2189, %s2242
        %v2244 = vpop.permute.xlu0 %2243
        %s2246 = sor.u32 256, 112
        %2247 = vbcast.lane.b32.xlu0 %v2189, %s2246
        %v2248 = vpop.permute.xlu0 %2247
        %s2250 = sor.u32 256, 120
        %2251 = vbcast.lane.b32.xlu0 %v2189, %s2250
        %v2252 = vpop.permute.xlu0 %2251
        %v2253 = vlaneseq
        %v2254 = vshrl.u32 %v2253, 7
        %v2255 = vsub.s32 1, %v2254
        %v2256 = vrot.slane %v319, %v2255
        %2258 = vbcast.lane.b32.xlu0 %v2256, 256
        %v2259 = vpop.permute.xlu0 %2258
        %s2261 = sor.u32 256, 8
        %2262 = vbcast.lane.b32.xlu0 %v2256, %s2261
        %v2263 = vpop.permute.xlu0 %2262
        %s2265 = sor.u32 256, 16
        %2266 = vbcast.lane.b32.xlu0 %v2256, %s2265
        %v2267 = vpop.permute.xlu0 %2266
        %s2269 = sor.u32 256, 24
        %2270 = vbcast.lane.b32.xlu0 %v2256, %s2269
        %v2271 = vpop.permute.xlu0 %2270
        %s2273 = sor.u32 256, 32
        %2274 = vbcast.lane.b32.xlu0 %v2256, %s2273
        %v2275 = vpop.permute.xlu0 %2274
        %s2277 = sor.u32 256, 40
        %2278 = vbcast.lane.b32.xlu0 %v2256, %s2277
        %v2279 = vpop.permute.xlu0 %2278
        %s2281 = sor.u32 256, 48
        %2282 = vbcast.lane.b32.xlu0 %v2256, %s2281
        %v2283 = vpop.permute.xlu0 %2282
        %s2285 = sor.u32 256, 56
        %2286 = vbcast.lane.b32.xlu0 %v2256, %s2285
        %v2287 = vpop.permute.xlu0 %2286
        %s2289 = sor.u32 256, 64
        %2290 = vbcast.lane.b32.xlu0 %v2256, %s2289
        %v2291 = vpop.permute.xlu0 %2290
        %s2293 = sor.u32 256, 72
        %2294 = vbcast.lane.b32.xlu0 %v2256, %s2293
        %v2295 = vpop.permute.xlu0 %2294
        %s2297 = sor.u32 256, 80
        %2298 = vbcast.lane.b32.xlu0 %v2256, %s2297
        %v2299 = vpop.permute.xlu0 %2298
        %s2301 = sor.u32 256, 88
        %2302 = vbcast.lane.b32.xlu0 %v2256, %s2301
        %v2303 = vpop.permute.xlu0 %2302
        %s2305 = sor.u32 256, 96
        %2306 = vbcast.lane.b32.xlu0 %v2256, %s2305
        %v2307 = vpop.permute.xlu0 %2306
        %s2309 = sor.u32 256, 104
        %2310 = vbcast.lane.b32.xlu0 %v2256, %s2309
        %v2311 = vpop.permute.xlu0 %2310
        %s2313 = sor.u32 256, 112
        %2314 = vbcast.lane.b32.xlu0 %v2256, %s2313
        %v2315 = vpop.permute.xlu0 %2314
        %s2317 = sor.u32 256, 120
        %2318 = vbcast.lane.b32.xlu0 %v2256, %s2317
        %v2319 = vpop.permute.xlu0 %2318
        %v2320 = vlaneseq
        %v2321 = vshrl.u32 %v2320, 7
        %v2322 = vsub.s32 2, %v2321
        %v2323 = vrot.slane %v319, %v2322
        %2325 = vbcast.lane.b32.xlu0 %v2323, 256
        %v2326 = vpop.permute.xlu0 %2325
        %s2328 = sor.u32 256, 8
        %2329 = vbcast.lane.b32.xlu0 %v2323, %s2328
        %v2330 = vpop.permute.xlu0 %2329
        %s2332 = sor.u32 256, 16
        %2333 = vbcast.lane.b32.xlu0 %v2323, %s2332
        %v2334 = vpop.permute.xlu0 %2333
        %s2336 = sor.u32 256, 24
        %2337 = vbcast.lane.b32.xlu0 %v2323, %s2336
        %v2338 = vpop.permute.xlu0 %2337
        %s2340 = sor.u32 256, 32
        %2341 = vbcast.lane.b32.xlu0 %v2323, %s2340
        %v2342 = vpop.permute.xlu0 %2341
        %s2344 = sor.u32 256, 40
        %2345 = vbcast.lane.b32.xlu0 %v2323, %s2344
        %v2346 = vpop.permute.xlu0 %2345
        %s2348 = sor.u32 256, 48
        %2349 = vbcast.lane.b32.xlu0 %v2323, %s2348
        %v2350 = vpop.permute.xlu0 %2349
        %s2352 = sor.u32 256, 56
        %2353 = vbcast.lane.b32.xlu0 %v2323, %s2352
        %v2354 = vpop.permute.xlu0 %2353
        %s2356 = sor.u32 256, 64
        %2357 = vbcast.lane.b32.xlu0 %v2323, %s2356
        %v2358 = vpop.permute.xlu0 %2357
        %s2360 = sor.u32 256, 72
        %2361 = vbcast.lane.b32.xlu0 %v2323, %s2360
        %v2362 = vpop.permute.xlu0 %2361
        %s2364 = sor.u32 256, 80
        %2365 = vbcast.lane.b32.xlu0 %v2323, %s2364
        %v2366 = vpop.permute.xlu0 %2365
        %s2368 = sor.u32 256, 88
        %2369 = vbcast.lane.b32.xlu0 %v2323, %s2368
        %v2370 = vpop.permute.xlu0 %2369
        %s2372 = sor.u32 256, 96
        %2373 = vbcast.lane.b32.xlu0 %v2323, %s2372
        %v2374 = vpop.permute.xlu0 %2373
        %s2376 = sor.u32 256, 104
        %2377 = vbcast.lane.b32.xlu0 %v2323, %s2376
        %v2378 = vpop.permute.xlu0 %2377
        %s2380 = sor.u32 256, 112
        %2381 = vbcast.lane.b32.xlu0 %v2323, %s2380
        %v2382 = vpop.permute.xlu0 %2381
        %s2384 = sor.u32 256, 120
        %2385 = vbcast.lane.b32.xlu0 %v2323, %s2384
        %v2386 = vpop.permute.xlu0 %2385
        %v2387 = vlaneseq
        %v2388 = vshrl.u32 %v2387, 7
        %v2389 = vsub.s32 3, %v2388
        %v2390 = vrot.slane %v319, %v2389
        %2392 = vbcast.lane.b32.xlu0 %v2390, 256
        %v2393 = vpop.permute.xlu0 %2392
        %s2395 = sor.u32 256, 8
        %2396 = vbcast.lane.b32.xlu0 %v2390, %s2395
        %v2397 = vpop.permute.xlu0 %2396
        %s2399 = sor.u32 256, 16
        %2400 = vbcast.lane.b32.xlu0 %v2390, %s2399
        %v2401 = vpop.permute.xlu0 %2400
        %s2403 = sor.u32 256, 24
        %2404 = vbcast.lane.b32.xlu0 %v2390, %s2403
        %v2405 = vpop.permute.xlu0 %2404
        %s2407 = sor.u32 256, 32
        %2408 = vbcast.lane.b32.xlu0 %v2390, %s2407
        %v2409 = vpop.permute.xlu0 %2408
        %s2411 = sor.u32 256, 40
        %2412 = vbcast.lane.b32.xlu0 %v2390, %s2411
        %v2413 = vpop.permute.xlu0 %2412
        %s2415 = sor.u32 256, 48
        %2416 = vbcast.lane.b32.xlu0 %v2390, %s2415
        %v2417 = vpop.permute.xlu0 %2416
        %s2419 = sor.u32 256, 56
        %2420 = vbcast.lane.b32.xlu0 %v2390, %s2419
        %v2421 = vpop.permute.xlu0 %2420
        %s2423 = sor.u32 256, 64
        %2424 = vbcast.lane.b32.xlu0 %v2390, %s2423
        %v2425 = vpop.permute.xlu0 %2424
        %s2427 = sor.u32 256, 72
        %2428 = vbcast.lane.b32.xlu0 %v2390, %s2427
        %v2429 = vpop.permute.xlu0 %2428
        %s2431 = sor.u32 256, 80
        %2432 = vbcast.lane.b32.xlu0 %v2390, %s2431
        %v2433 = vpop.permute.xlu0 %2432
        %s2435 = sor.u32 256, 88
        %2436 = vbcast.lane.b32.xlu0 %v2390, %s2435
        %v2437 = vpop.permute.xlu0 %2436
        %s2439 = sor.u32 256, 96
        %2440 = vbcast.lane.b32.xlu0 %v2390, %s2439
        %v2441 = vpop.permute.xlu0 %2440
        %s2443 = sor.u32 256, 104
        %2444 = vbcast.lane.b32.xlu0 %v2390, %s2443
        %v2445 = vpop.permute.xlu0 %2444
        %s2447 = sor.u32 256, 112
        %2448 = vbcast.lane.b32.xlu0 %v2390, %s2447
        %v2449 = vpop.permute.xlu0 %2448
        %s2451 = sor.u32 256, 120
        %2452 = vbcast.lane.b32.xlu0 %v2390, %s2451
        %v2453 = vpop.permute.xlu0 %2452
        %v2454 = vlaneseq
        %v2455 = vshrl.u32 %v2454, 7
        %v2456 = vsub.s32 4, %v2455
        %v2457 = vrot.slane %v319, %v2456
        %2459 = vbcast.lane.b32.xlu0 %v2457, 256
        %v2460 = vpop.permute.xlu0 %2459
        %s2462 = sor.u32 256, 8
        %2463 = vbcast.lane.b32.xlu0 %v2457, %s2462
        %v2464 = vpop.permute.xlu0 %2463
        %s2466 = sor.u32 256, 16
        %2467 = vbcast.lane.b32.xlu0 %v2457, %s2466
        %v2468 = vpop.permute.xlu0 %2467
        %s2470 = sor.u32 256, 24
        %2471 = vbcast.lane.b32.xlu0 %v2457, %s2470
        %v2472 = vpop.permute.xlu0 %2471
        %s2474 = sor.u32 256, 32
        %2475 = vbcast.lane.b32.xlu0 %v2457, %s2474
        %v2476 = vpop.permute.xlu0 %2475
        %s2478 = sor.u32 256, 40
        %2479 = vbcast.lane.b32.xlu0 %v2457, %s2478
        %v2480 = vpop.permute.xlu0 %2479
        %s2482 = sor.u32 256, 48
        %2483 = vbcast.lane.b32.xlu0 %v2457, %s2482
        %v2484 = vpop.permute.xlu0 %2483
        %s2486 = sor.u32 256, 56
        %2487 = vbcast.lane.b32.xlu0 %v2457, %s2486
        %v2488 = vpop.permute.xlu0 %2487
        %s2490 = sor.u32 256, 64
        %2491 = vbcast.lane.b32.xlu0 %v2457, %s2490
        %v2492 = vpop.permute.xlu0 %2491
        %s2494 = sor.u32 256, 72
        %2495 = vbcast.lane.b32.xlu0 %v2457, %s2494
        %v2496 = vpop.permute.xlu0 %2495
        %s2498 = sor.u32 256, 80
        %2499 = vbcast.lane.b32.xlu0 %v2457, %s2498
        %v2500 = vpop.permute.xlu0 %2499
        %s2502 = sor.u32 256, 88
        %2503 = vbcast.lane.b32.xlu0 %v2457, %s2502
        %v2504 = vpop.permute.xlu0 %2503
        %s2506 = sor.u32 256, 96
        %2507 = vbcast.lane.b32.xlu0 %v2457, %s2506
        %v2508 = vpop.permute.xlu0 %2507
        %s2510 = sor.u32 256, 104
        %2511 = vbcast.lane.b32.xlu0 %v2457, %s2510
        %v2512 = vpop.permute.xlu0 %2511
        %s2514 = sor.u32 256, 112
        %2515 = vbcast.lane.b32.xlu0 %v2457, %s2514
        %v2516 = vpop.permute.xlu0 %2515
        %s2518 = sor.u32 256, 120
        %2519 = vbcast.lane.b32.xlu0 %v2457, %s2518
        %v2520 = vpop.permute.xlu0 %2519
        %v2521 = vlaneseq
        %v2522 = vshrl.u32 %v2521, 7
        %v2523 = vsub.s32 5, %v2522
        %v2524 = vrot.slane %v319, %v2523
        %2526 = vbcast.lane.b32.xlu0 %v2524, 256
        %v2527 = vpop.permute.xlu0 %2526
        %s2529 = sor.u32 256, 8
        %2530 = vbcast.lane.b32.xlu0 %v2524, %s2529
        %v2531 = vpop.permute.xlu0 %2530
        %s2533 = sor.u32 256, 16
        %2534 = vbcast.lane.b32.xlu0 %v2524, %s2533
        %v2535 = vpop.permute.xlu0 %2534
        %s2537 = sor.u32 256, 24
        %2538 = vbcast.lane.b32.xlu0 %v2524, %s2537
        %v2539 = vpop.permute.xlu0 %2538
        %s2541 = sor.u32 256, 32
        %2542 = vbcast.lane.b32.xlu0 %v2524, %s2541
        %v2543 = vpop.permute.xlu0 %2542
        %s2545 = sor.u32 256, 40
        %2546 = vbcast.lane.b32.xlu0 %v2524, %s2545
        %v2547 = vpop.permute.xlu0 %2546
        %s2549 = sor.u32 256, 48
        %2550 = vbcast.lane.b32.xlu0 %v2524, %s2549
        %v2551 = vpop.permute.xlu0 %2550
        %s2553 = sor.u32 256, 56
        %2554 = vbcast.lane.b32.xlu0 %v2524, %s2553
        %v2555 = vpop.permute.xlu0 %2554
        %s2557 = sor.u32 256, 64
        %2558 = vbcast.lane.b32.xlu0 %v2524, %s2557
        %v2559 = vpop.permute.xlu0 %2558
        %s2561 = sor.u32 256, 72
        %2562 = vbcast.lane.b32.xlu0 %v2524, %s2561
        %v2563 = vpop.permute.xlu0 %2562
        %s2565 = sor.u32 256, 80
        %2566 = vbcast.lane.b32.xlu0 %v2524, %s2565
        %v2567 = vpop.permute.xlu0 %2566
        %s2569 = sor.u32 256, 88
        %2570 = vbcast.lane.b32.xlu0 %v2524, %s2569
        %v2571 = vpop.permute.xlu0 %2570
        %s2573 = sor.u32 256, 96
        %2574 = vbcast.lane.b32.xlu0 %v2524, %s2573
        %v2575 = vpop.permute.xlu0 %2574
        %s2577 = sor.u32 256, 104
        %2578 = vbcast.lane.b32.xlu0 %v2524, %s2577
        %v2579 = vpop.permute.xlu0 %2578
        %s2581 = sor.u32 256, 112
        %2582 = vbcast.lane.b32.xlu0 %v2524, %s2581
        %v2583 = vpop.permute.xlu0 %2582
        %s2585 = sor.u32 256, 120
        %2586 = vbcast.lane.b32.xlu0 %v2524, %s2585
        %v2587 = vpop.permute.xlu0 %2586
        %v2588 = vlaneseq
        %v2589 = vshrl.u32 %v2588, 7
        %v2590 = vsub.s32 6, %v2589
        %v2591 = vrot.slane %v319, %v2590
        %2593 = vbcast.lane.b32.xlu0 %v2591, 256
        %v2594 = vpop.permute.xlu0 %2593
        %s2596 = sor.u32 256, 8
        %2597 = vbcast.lane.b32.xlu0 %v2591, %s2596
        %v2598 = vpop.permute.xlu0 %2597
        %s2600 = sor.u32 256, 16
        %2601 = vbcast.lane.b32.xlu0 %v2591, %s2600
        %v2602 = vpop.permute.xlu0 %2601
        %s2604 = sor.u32 256, 24
        %2605 = vbcast.lane.b32.xlu0 %v2591, %s2604
        %v2606 = vpop.permute.xlu0 %2605
        %s2608 = sor.u32 256, 32
        %2609 = vbcast.lane.b32.xlu0 %v2591, %s2608
        %v2610 = vpop.permute.xlu0 %2609
        %s2612 = sor.u32 256, 40
        %2613 = vbcast.lane.b32.xlu0 %v2591, %s2612
        %v2614 = vpop.permute.xlu0 %2613
        %s2616 = sor.u32 256, 48
        %2617 = vbcast.lane.b32.xlu0 %v2591, %s2616
        %v2618 = vpop.permute.xlu0 %2617
        %s2620 = sor.u32 256, 56
        %2621 = vbcast.lane.b32.xlu0 %v2591, %s2620
        %v2622 = vpop.permute.xlu0 %2621
        %s2624 = sor.u32 256, 64
        %2625 = vbcast.lane.b32.xlu0 %v2591, %s2624
        %v2626 = vpop.permute.xlu0 %2625
        %s2628 = sor.u32 256, 72
        %2629 = vbcast.lane.b32.xlu0 %v2591, %s2628
        %v2630 = vpop.permute.xlu0 %2629
        %s2632 = sor.u32 256, 80
        %2633 = vbcast.lane.b32.xlu0 %v2591, %s2632
        %v2634 = vpop.permute.xlu0 %2633
        %s2636 = sor.u32 256, 88
        %2637 = vbcast.lane.b32.xlu0 %v2591, %s2636
        %v2638 = vpop.permute.xlu0 %2637
        %s2640 = sor.u32 256, 96
        %2641 = vbcast.lane.b32.xlu0 %v2591, %s2640
        %v2642 = vpop.permute.xlu0 %2641
        %s2644 = sor.u32 256, 104
        %2645 = vbcast.lane.b32.xlu0 %v2591, %s2644
        %v2646 = vpop.permute.xlu0 %2645
        %s2648 = sor.u32 256, 112
        %2649 = vbcast.lane.b32.xlu0 %v2591, %s2648
        %v2650 = vpop.permute.xlu0 %2649
        %s2652 = sor.u32 256, 120
        %2653 = vbcast.lane.b32.xlu0 %v2591, %s2652
        %v2654 = vpop.permute.xlu0 %2653
        %v2655 = vlaneseq
        %v2656 = vshrl.u32 %v2655, 7
        %v2657 = vsub.s32 7, %v2656
        %v2658 = vrot.slane %v319, %v2657
        %2660 = vbcast.lane.b32.xlu0 %v2658, 256
        %v2661 = vpop.permute.xlu0 %2660
        %s2663 = sor.u32 256, 8
        %2664 = vbcast.lane.b32.xlu0 %v2658, %s2663
        %v2665 = vpop.permute.xlu0 %2664
        %s2667 = sor.u32 256, 16
        %2668 = vbcast.lane.b32.xlu0 %v2658, %s2667
        %v2669 = vpop.permute.xlu0 %2668
        %s2671 = sor.u32 256, 24
        %2672 = vbcast.lane.b32.xlu0 %v2658, %s2671
        %v2673 = vpop.permute.xlu0 %2672
        %s2675 = sor.u32 256, 32
        %2676 = vbcast.lane.b32.xlu0 %v2658, %s2675
        %v2677 = vpop.permute.xlu0 %2676
        %s2679 = sor.u32 256, 40
        %2680 = vbcast.lane.b32.xlu0 %v2658, %s2679
        %v2681 = vpop.permute.xlu0 %2680
        %s2683 = sor.u32 256, 48
        %2684 = vbcast.lane.b32.xlu0 %v2658, %s2683
        %v2685 = vpop.permute.xlu0 %2684
        %s2687 = sor.u32 256, 56
        %2688 = vbcast.lane.b32.xlu0 %v2658, %s2687
        %v2689 = vpop.permute.xlu0 %2688
        %s2691 = sor.u32 256, 64
        %2692 = vbcast.lane.b32.xlu0 %v2658, %s2691
        %v2693 = vpop.permute.xlu0 %2692
        %s2695 = sor.u32 256, 72
        %2696 = vbcast.lane.b32.xlu0 %v2658, %s2695
        %v2697 = vpop.permute.xlu0 %2696
        %s2699 = sor.u32 256, 80
        %2700 = vbcast.lane.b32.xlu0 %v2658, %s2699
        %v2701 = vpop.permute.xlu0 %2700
        %s2703 = sor.u32 256, 88
        %2704 = vbcast.lane.b32.xlu0 %v2658, %s2703
        %v2705 = vpop.permute.xlu0 %2704
        %s2707 = sor.u32 256, 96
        %2708 = vbcast.lane.b32.xlu0 %v2658, %s2707
        %v2709 = vpop.permute.xlu0 %2708
        %s2711 = sor.u32 256, 104
        %2712 = vbcast.lane.b32.xlu0 %v2658, %s2711
        %v2713 = vpop.permute.xlu0 %2712
        %s2715 = sor.u32 256, 112
        %2716 = vbcast.lane.b32.xlu0 %v2658, %s2715
        %v2717 = vpop.permute.xlu0 %2716
        %s2719 = sor.u32 256, 120
        %2720 = vbcast.lane.b32.xlu0 %v2658, %s2719
        %v2721 = vpop.permute.xlu0 %2720
        %v2722 = vsel %vm1394, %v1656, 0.0
        %v2723 = vsel %vm1395, %v1660, 0.0
        %v2724 = vsel %vm1396, %v1664, 0.0
        %v2725 = vsel %vm1397, %v1668, 0.0
        %v2726 = vsel %vm1398, %v1672, 0.0
        %v2727 = vsel %vm1399, %v1676, 0.0
        %v2728 = vsel %vm1400, %v1680, 0.0
        %v2729 = vsel %vm1401, %v1684, 0.0
        %v2730 = vsel %vm1402, %v1688, 0.0
        %v2731 = vsel %vm1403, %v1692, 0.0
        %v2732 = vsel %vm1404, %v1696, 0.0
        %v2733 = vsel %vm1405, %v1700, 0.0
        %v2734 = vsel %vm1406, %v1704, 0.0
        %v2735 = vsel %vm1407, %v1708, 0.0
        %v2736 = vsel %vm1408, %v1712, 0.0
        %v2737 = vsel %vm1409, %v1716, 0.0
        %v2738 = vsel %vm1410, %v1723, 0.0
        %v2739 = vsel %vm1411, %v1727, 0.0
        %v2740 = vsel %vm1412, %v1731, 0.0
        %v2741 = vsel %vm1413, %v1735, 0.0
        %v2742 = vsel %vm1414, %v1739, 0.0
        %v2743 = vsel %vm1415, %v1743, 0.0
        %v2744 = vsel %vm1416, %v1747, 0.0
        %v2745 = vsel %vm1417, %v1751, 0.0
        %v2746 = vsel %vm1418, %v1755, 0.0
        %v2747 = vsel %vm1419, %v1759, 0.0
        %v2748 = vsel %vm1420, %v1763, 0.0
        %v2749 = vsel %vm1421, %v1767, 0.0
        %v2750 = vsel %vm1422, %v1771, 0.0
        %v2751 = vsel %vm1423, %v1775, 0.0
        %v2752 = vsel %vm1424, %v1779, 0.0
        %v2753 = vsel %vm1425, %v1783, 0.0
        %v2754 = vsel %vm1426, %v1790, 0.0
        %v2755 = vsel %vm1427, %v1794, 0.0
        %v2756 = vsel %vm1428, %v1798, 0.0
        %v2757 = vsel %vm1429, %v1802, 0.0
        %v2758 = vsel %vm1430, %v1806, 0.0
        %v2759 = vsel %vm1431, %v1810, 0.0
        %v2760 = vsel %vm1432, %v1814, 0.0
        %v2761 = vsel %vm1433, %v1818, 0.0
        %v2762 = vsel %vm1434, %v1822, 0.0
        %v2763 = vsel %vm1435, %v1826, 0.0
        %v2764 = vsel %vm1436, %v1830, 0.0
        %v2765 = vsel %vm1437, %v1834, 0.0
        %v2766 = vsel %vm1438, %v1838, 0.0
        %v2767 = vsel %vm1439, %v1842, 0.0
        %v2768 = vsel %vm1440, %v1846, 0.0
        %v2769 = vsel %vm1441, %v1850, 0.0
        %v2770 = vsel %vm1442, %v1857, 0.0
        %v2771 = vsel %vm1443, %v1861, 0.0
        %v2772 = vsel %vm1444, %v1865, 0.0
        %v2773 = vsel %vm1445, %v1869, 0.0
        %v2774 = vsel %vm1446, %v1873, 0.0
        %v2775 = vsel %vm1447, %v1877, 0.0
        %v2776 = vsel %vm1448, %v1881, 0.0
        %v2777 = vsel %vm1449, %v1885, 0.0
        %v2778 = vsel %vm1450, %v1889, 0.0
        %v2779 = vsel %vm1451, %v1893, 0.0
        %v2780 = vsel %vm1452, %v1897, 0.0
        %v2781 = vsel %vm1453, %v1901, 0.0
        %v2782 = vsel %vm1454, %v1905, 0.0
        %v2783 = vsel %vm1455, %v1909, 0.0
        %v2784 = vsel %vm1456, %v1913, 0.0
        %v2785 = vsel %vm1457, %v1917, 0.0
        %v2786 = vsel %vm1458, %v1924, 0.0
        %v2787 = vsel %vm1459, %v1928, 0.0
        %v2788 = vsel %vm1460, %v1932, 0.0
        %v2789 = vsel %vm1461, %v1936, 0.0
        %v2790 = vsel %vm1462, %v1940, 0.0
        %v2791 = vsel %vm1463, %v1944, 0.0
        %v2792 = vsel %vm1464, %v1948, 0.0
        %v2793 = vsel %vm1465, %v1952, 0.0
        %v2794 = vsel %vm1466, %v1956, 0.0
        %v2795 = vsel %vm1467, %v1960, 0.0
        %v2796 = vsel %vm1468, %v1964, 0.0
        %v2797 = vsel %vm1469, %v1968, 0.0
        %v2798 = vsel %vm1470, %v1972, 0.0
        %v2799 = vsel %vm1471, %v1976, 0.0
        %v2800 = vsel %vm1472, %v1980, 0.0
        %v2801 = vsel %vm1473, %v1984, 0.0
        %v2802 = vsel %vm1474, %v1991, 0.0
        %v2803 = vsel %vm1475, %v1995, 0.0
        %v2804 = vsel %vm1476, %v1999, 0.0
        %v2805 = vsel %vm1477, %v2003, 0.0
        %v2806 = vsel %vm1478, %v2007, 0.0
        %v2807 = vsel %vm1479, %v2011, 0.0
        %v2808 = vsel %vm1480, %v2015, 0.0
        %v2809 = vsel %vm1481, %v2019, 0.0
        %v2810 = vsel %vm1482, %v2023, 0.0
        %v2811 = vsel %vm1483, %v2027, 0.0
        %v2812 = vsel %vm1484, %v2031, 0.0
        %v2813 = vsel %vm1485, %v2035, 0.0
        %v2814 = vsel %vm1486, %v2039, 0.0
        %v2815 = vsel %vm1487, %v2043, 0.0
        %v2816 = vsel %vm1488, %v2047, 0.0
        %v2817 = vsel %vm1489, %v2051, 0.0
        %v2818 = vsel %vm1490, %v2058, 0.0
        %v2819 = vsel %vm1491, %v2062, 0.0
        %v2820 = vsel %vm1492, %v2066, 0.0
        %v2821 = vsel %vm1493, %v2070, 0.0
        %v2822 = vsel %vm1494, %v2074, 0.0
        %v2823 = vsel %vm1495, %v2078, 0.0
        %v2824 = vsel %vm1496, %v2082, 0.0
        %v2825 = vsel %vm1497, %v2086, 0.0
        %v2826 = vsel %vm1498, %v2090, 0.0
        %v2827 = vsel %vm1499, %v2094, 0.0
        %v2828 = vsel %vm1500, %v2098, 0.0
        %v2829 = vsel %vm1501, %v2102, 0.0
        %v2830 = vsel %vm1502, %v2106, 0.0
        %v2831 = vsel %vm1503, %v2110, 0.0
        %v2832 = vsel %vm1504, %v2114, 0.0
        %v2833 = vsel %vm1505, %v2118, 0.0
        %v2834 = vsel %vm1506, %v2125, 0.0
        %v2835 = vsel %vm1507, %v2129, 0.0
        %v2836 = vsel %vm1508, %v2133, 0.0
        %v2837 = vsel %vm1509, %v2137, 0.0
        %v2838 = vsel %vm1510, %v2141, 0.0
        %v2839 = vsel %vm1511, %v2145, 0.0
        %v2840 = vsel %vm1512, %v2149, 0.0
        %v2841 = vsel %vm1513, %v2153, 0.0
        %v2842 = vsel %vm1514, %v2157, 0.0
        %v2843 = vsel %vm1515, %v2161, 0.0
        %v2844 = vsel %vm1516, %v2165, 0.0
        %v2845 = vsel %vm1517, %v2169, 0.0
        %v2846 = vsel %vm1518, %v2173, 0.0
        %v2847 = vsel %vm1519, %v2177, 0.0
        %v2848 = vsel %vm1520, %v2181, 0.0
        %v2849 = vsel %vm1521, %v2185, 0.0
        %v2850 = vsel %vm1522, %v2192, 0.0
        %v2851 = vsel %vm1523, %v2196, 0.0
        %v2852 = vsel %vm1524, %v2200, 0.0
        %v2853 = vsel %vm1525, %v2204, 0.0
        %v2854 = vsel %vm1526, %v2208, 0.0
        %v2855 = vsel %vm1527, %v2212, 0.0
        %v2856 = vsel %vm1528, %v2216, 0.0
        %v2857 = vsel %vm1529, %v2220, 0.0
        %v2858 = vsel %vm1530, %v2224, 0.0
        %v2859 = vsel %vm1531, %v2228, 0.0
        %v2860 = vsel %vm1532, %v2232, 0.0
        %v2861 = vsel %vm1533, %v2236, 0.0
        %v2862 = vsel %vm1534, %v2240, 0.0
        %v2863 = vsel %vm1535, %v2244, 0.0
        %v2864 = vsel %vm1536, %v2248, 0.0
        %v2865 = vsel %vm1537, %v2252, 0.0
        %v2866 = vsel %vm1538, %v2259, 0.0
        %v2867 = vsel %vm1539, %v2263, 0.0
        %v2868 = vsel %vm1540, %v2267, 0.0
        %v2869 = vsel %vm1541, %v2271, 0.0
        %v2870 = vsel %vm1542, %v2275, 0.0
        %v2871 = vsel %vm1543, %v2279, 0.0
        %v2872 = vsel %vm1544, %v2283, 0.0
        %v2873 = vsel %vm1545, %v2287, 0.0
        %v2874 = vsel %vm1546, %v2291, 0.0
        %v2875 = vsel %vm1547, %v2295, 0.0
        %v2876 = vsel %vm1548, %v2299, 0.0
        %v2877 = vsel %vm1549, %v2303, 0.0
        %v2878 = vsel %vm1550, %v2307, 0.0
        %v2879 = vsel %vm1551, %v2311, 0.0
        %v2880 = vsel %vm1552, %v2315, 0.0
        %v2881 = vsel %vm1553, %v2319, 0.0
        %v2882 = vsel %vm1554, %v2326, 0.0
        %v2883 = vsel %vm1555, %v2330, 0.0
        %v2884 = vsel %vm1556, %v2334, 0.0
        %v2885 = vsel %vm1557, %v2338, 0.0
        %v2886 = vsel %vm1558, %v2342, 0.0
        %v2887 = vsel %vm1559, %v2346, 0.0
        %v2888 = vsel %vm1560, %v2350, 0.0
        %v2889 = vsel %vm1561, %v2354, 0.0
        %v2890 = vsel %vm1562, %v2358, 0.0
        %v2891 = vsel %vm1563, %v2362, 0.0
        %v2892 = vsel %vm1564, %v2366, 0.0
        %v2893 = vsel %vm1565, %v2370, 0.0
        %v2894 = vsel %vm1566, %v2374, 0.0
        %v2895 = vsel %vm1567, %v2378, 0.0
        %v2896 = vsel %vm1568, %v2382, 0.0
        %v2897 = vsel %vm1569, %v2386, 0.0
        %v2898 = vsel %vm1570, %v2393, 0.0
        %v2899 = vsel %vm1571, %v2397, 0.0
        %v2900 = vsel %vm1572, %v2401, 0.0
        %v2901 = vsel %vm1573, %v2405, 0.0
        %v2902 = vsel %vm1574, %v2409, 0.0
        %v2903 = vsel %vm1575, %v2413, 0.0
        %v2904 = vsel %vm1576, %v2417, 0.0
        %v2905 = vsel %vm1577, %v2421, 0.0
        %v2906 = vsel %vm1578, %v2425, 0.0
        %v2907 = vsel %vm1579, %v2429, 0.0
        %v2908 = vsel %vm1580, %v2433, 0.0
        %v2909 = vsel %vm1581, %v2437, 0.0
        %v2910 = vsel %vm1582, %v2441, 0.0
        %v2911 = vsel %vm1583, %v2445, 0.0
        %v2912 = vsel %vm1584, %v2449, 0.0
        %v2913 = vsel %vm1585, %v2453, 0.0
        %v2914 = vsel %vm1586, %v2460, 0.0
        %v2915 = vsel %vm1587, %v2464, 0.0
        %v2916 = vsel %vm1588, %v2468, 0.0
        %v2917 = vsel %vm1589, %v2472, 0.0
        %v2918 = vsel %vm1590, %v2476, 0.0
        %v2919 = vsel %vm1591, %v2480, 0.0
        %v2920 = vsel %vm1592, %v2484, 0.0
        %v2921 = vsel %vm1593, %v2488, 0.0
        %v2922 = vsel %vm1594, %v2492, 0.0
        %v2923 = vsel %vm1595, %v2496, 0.0
        %v2924 = vsel %vm1596, %v2500, 0.0
        %v2925 = vsel %vm1597, %v2504, 0.0
        %v2926 = vsel %vm1598, %v2508, 0.0
        %v2927 = vsel %vm1599, %v2512, 0.0
        %v2928 = vsel %vm1600, %v2516, 0.0
        %v2929 = vsel %vm1601, %v2520, 0.0
        %v2930 = vsel %vm1602, %v2527, 0.0
        %v2931 = vsel %vm1603, %v2531, 0.0
        %v2932 = vsel %vm1604, %v2535, 0.0
        %v2933 = vsel %vm1605, %v2539, 0.0
        %v2934 = vsel %vm1606, %v2543, 0.0
        %v2935 = vsel %vm1607, %v2547, 0.0
        %v2936 = vsel %vm1608, %v2551, 0.0
        %v2937 = vsel %vm1609, %v2555, 0.0
        %v2938 = vsel %vm1610, %v2559, 0.0
        %v2939 = vsel %vm1611, %v2563, 0.0
        %v2940 = vsel %vm1612, %v2567, 0.0
        %v2941 = vsel %vm1613, %v2571, 0.0
        %v2942 = vsel %vm1614, %v2575, 0.0
        %v2943 = vsel %vm1615, %v2579, 0.0
        %v2944 = vsel %vm1616, %v2583, 0.0
        %v2945 = vsel %vm1617, %v2587, 0.0
        %v2946 = vsel %vm1618, %v2594, 0.0
        %v2947 = vsel %vm1619, %v2598, 0.0
        %v2948 = vsel %vm1620, %v2602, 0.0
        %v2949 = vsel %vm1621, %v2606, 0.0
        %v2950 = vsel %vm1622, %v2610, 0.0
        %v2951 = vsel %vm1623, %v2614, 0.0
        %v2952 = vsel %vm1624, %v2618, 0.0
        %v2953 = vsel %vm1625, %v2622, 0.0
        %v2954 = vsel %vm1626, %v2626, 0.0
        %v2955 = vsel %vm1627, %v2630, 0.0
        %v2956 = vsel %vm1628, %v2634, 0.0
        %v2957 = vsel %vm1629, %v2638, 0.0
        %v2958 = vsel %vm1630, %v2642, 0.0
        %v2959 = vsel %vm1631, %v2646, 0.0
        %v2960 = vsel %vm1632, %v2650, 0.0
        %v2961 = vsel %vm1633, %v2654, 0.0
        %v2962 = vsel %vm1634, %v2661, 0.0
        %v2963 = vsel %vm1635, %v2665, 0.0
        %v2964 = vsel %vm1636, %v2669, 0.0
        %v2965 = vsel %vm1637, %v2673, 0.0
        %v2966 = vsel %vm1638, %v2677, 0.0
        %v2967 = vsel %vm1639, %v2681, 0.0
        %v2968 = vsel %vm1640, %v2685, 0.0
        %v2969 = vsel %vm1641, %v2689, 0.0
        %v2970 = vsel %vm1642, %v2693, 0.0
        %v2971 = vsel %vm1643, %v2697, 0.0
        %v2972 = vsel %vm1644, %v2701, 0.0
        %v2973 = vsel %vm1645, %v2705, 0.0
        %v2974 = vsel %vm1646, %v2709, 0.0
        %v2975 = vsel %vm1647, %v2713, 0.0
        %v2976 = vsel %vm1648, %v2717, 0.0
        %v2977 = vsel %vm1649, %v2721, 0.0
        %v2978 = vadd.f32 %v2722, %v2723
        %v2979 = vadd.f32 %v2978, %v2724
        %v2980 = vadd.f32 %v2979, %v2725
        %v2981 = vadd.f32 %v2980, %v2726
        %v2982 = vadd.f32 %v2981, %v2727
        %v2983 = vadd.f32 %v2982, %v2728
        %v2984 = vadd.f32 %v2983, %v2729
        %v2985 = vadd.f32 %v2984, %v2730
        %v2986 = vadd.f32 %v2985, %v2731
        %v2987 = vadd.f32 %v2986, %v2732
        %v2988 = vadd.f32 %v2987, %v2733
        %v2989 = vadd.f32 %v2988, %v2734
        %v2990 = vadd.f32 %v2989, %v2735
        %v2991 = vadd.f32 %v2990, %v2736
        %v2992 = vadd.f32 %v2991, %v2737
        %v2993 = vrot.slane %v2992, 4
        %v2994 = vadd.f32 %v2992, %v2993
        %v2995 = vrot.slane %v2994, 2
        %v2996 = vadd.f32 %v2994, %v2995
        %v2997 = vrot.slane %v2996, 1
        %v2998 = vadd.f32 %v2996, %v2997
        %v2999 = vadd.f32 %v2738, %v2739
        %v3000 = vadd.f32 %v2999, %v2740
        %v3001 = vadd.f32 %v3000, %v2741
        %v3002 = vadd.f32 %v3001, %v2742
        %v3003 = vadd.f32 %v3002, %v2743
        %v3004 = vadd.f32 %v3003, %v2744
        %v3005 = vadd.f32 %v3004, %v2745
        %v3006 = vadd.f32 %v3005, %v2746
        %v3007 = vadd.f32 %v3006, %v2747
        %v3008 = vadd.f32 %v3007, %v2748
        %v3009 = vadd.f32 %v3008, %v2749
        %v3010 = vadd.f32 %v3009, %v2750
        %v3011 = vadd.f32 %v3010, %v2751
        %v3012 = vadd.f32 %v3011, %v2752
        %v3013 = vadd.f32 %v3012, %v2753
        %v3014 = vrot.slane %v3013, 4
        %v3015 = vadd.f32 %v3013, %v3014
        %v3016 = vrot.slane %v3015, 2
        %v3017 = vadd.f32 %v3015, %v3016
        %v3018 = vrot.slane %v3017, 1
        %v3019 = vadd.f32 %v3017, %v3018
        %v3020 = vadd.f32 %v2754, %v2755
        %v3021 = vadd.f32 %v3020, %v2756
        %v3022 = vadd.f32 %v3021, %v2757
        %v3023 = vadd.f32 %v3022, %v2758
        %v3024 = vadd.f32 %v3023, %v2759
        %v3025 = vadd.f32 %v3024, %v2760
        %v3026 = vadd.f32 %v3025, %v2761
        %v3027 = vadd.f32 %v3026, %v2762
        %v3028 = vadd.f32 %v3027, %v2763
        %v3029 = vadd.f32 %v3028, %v2764
        %v3030 = vadd.f32 %v3029, %v2765
        %v3031 = vadd.f32 %v3030, %v2766
        %v3032 = vadd.f32 %v3031, %v2767
        %v3033 = vadd.f32 %v3032, %v2768
        %v3034 = vadd.f32 %v3033, %v2769
        %v3035 = vrot.slane %v3034, 4
        %v3036 = vadd.f32 %v3034, %v3035
        %v3037 = vrot.slane %v3036, 2
        %v3038 = vadd.f32 %v3036, %v3037
        %v3039 = vrot.slane %v3038, 1
        %v3040 = vadd.f32 %v3038, %v3039
        %v3041 = vadd.f32 %v2770, %v2771
        %v3042 = vadd.f32 %v3041, %v2772
        %v3043 = vadd.f32 %v3042, %v2773
        %v3044 = vadd.f32 %v3043, %v2774
        %v3045 = vadd.f32 %v3044, %v2775
        %v3046 = vadd.f32 %v3045, %v2776
        %v3047 = vadd.f32 %v3046, %v2777
        %v3048 = vadd.f32 %v3047, %v2778
        %v3049 = vadd.f32 %v3048, %v2779
        %v3050 = vadd.f32 %v3049, %v2780
        %v3051 = vadd.f32 %v3050, %v2781
        %v3052 = vadd.f32 %v3051, %v2782
        %v3053 = vadd.f32 %v3052, %v2783
        %v3054 = vadd.f32 %v3053, %v2784
        %v3055 = vadd.f32 %v3054, %v2785
        %v3056 = vrot.slane %v3055, 4
        %v3057 = vadd.f32 %v3055, %v3056
        %v3058 = vrot.slane %v3057, 2
        %v3059 = vadd.f32 %v3057, %v3058
        %v3060 = vrot.slane %v3059, 1
        %v3061 = vadd.f32 %v3059, %v3060
        %v3062 = vadd.f32 %v2786, %v2787
        %v3063 = vadd.f32 %v3062, %v2788
        %v3064 = vadd.f32 %v3063, %v2789
        %v3065 = vadd.f32 %v3064, %v2790
        %v3066 = vadd.f32 %v3065, %v2791
        %v3067 = vadd.f32 %v3066, %v2792
        %v3068 = vadd.f32 %v3067, %v2793
        %v3069 = vadd.f32 %v3068, %v2794
        %v3070 = vadd.f32 %v3069, %v2795
        %v3071 = vadd.f32 %v3070, %v2796
        %v3072 = vadd.f32 %v3071, %v2797
        %v3073 = vadd.f32 %v3072, %v2798
        %v3074 = vadd.f32 %v3073, %v2799
        %v3075 = vadd.f32 %v3074, %v2800
        %v3076 = vadd.f32 %v3075, %v2801
        %v3077 = vrot.slane %v3076, 4
        %v3078 = vadd.f32 %v3076, %v3077
        %v3079 = vrot.slane %v3078, 2
        %v3080 = vadd.f32 %v3078, %v3079
        %v3081 = vrot.slane %v3080, 1
        %v3082 = vadd.f32 %v3080, %v3081
        %v3083 = vadd.f32 %v2802, %v2803
        %v3084 = vadd.f32 %v3083, %v2804
        %v3085 = vadd.f32 %v3084, %v2805
        %v3086 = vadd.f32 %v3085, %v2806
        %v3087 = vadd.f32 %v3086, %v2807
        %v3088 = vadd.f32 %v3087, %v2808
        %v3089 = vadd.f32 %v3088, %v2809
        %v3090 = vadd.f32 %v3089, %v2810
        %v3091 = vadd.f32 %v3090, %v2811
        %v3092 = vadd.f32 %v3091, %v2812
        %v3093 = vadd.f32 %v3092, %v2813
        %v3094 = vadd.f32 %v3093, %v2814
        %v3095 = vadd.f32 %v3094, %v2815
        %v3096 = vadd.f32 %v3095, %v2816
        %v3097 = vadd.f32 %v3096, %v2817
        %v3098 = vrot.slane %v3097, 4
        %v3099 = vadd.f32 %v3097, %v3098
        %v3100 = vrot.slane %v3099, 2
        %v3101 = vadd.f32 %v3099, %v3100
        %v3102 = vrot.slane %v3101, 1
        %v3103 = vadd.f32 %v3101, %v3102
        %v3104 = vadd.f32 %v2818, %v2819
        %v3105 = vadd.f32 %v3104, %v2820
        %v3106 = vadd.f32 %v3105, %v2821
        %v3107 = vadd.f32 %v3106, %v2822
        %v3108 = vadd.f32 %v3107, %v2823
        %v3109 = vadd.f32 %v3108, %v2824
        %v3110 = vadd.f32 %v3109, %v2825
        %v3111 = vadd.f32 %v3110, %v2826
        %v3112 = vadd.f32 %v3111, %v2827
        %v3113 = vadd.f32 %v3112, %v2828
        %v3114 = vadd.f32 %v3113, %v2829
        %v3115 = vadd.f32 %v3114, %v2830
        %v3116 = vadd.f32 %v3115, %v2831
        %v3117 = vadd.f32 %v3116, %v2832
        %v3118 = vadd.f32 %v3117, %v2833
        %v3119 = vrot.slane %v3118, 4
        %v3120 = vadd.f32 %v3118, %v3119
        %v3121 = vrot.slane %v3120, 2
        %v3122 = vadd.f32 %v3120, %v3121
        %v3123 = vrot.slane %v3122, 1
        %v3124 = vadd.f32 %v3122, %v3123
        %v3125 = vadd.f32 %v2834, %v2835
        %v3126 = vadd.f32 %v3125, %v2836
        %v3127 = vadd.f32 %v3126, %v2837
        %v3128 = vadd.f32 %v3127, %v2838
        %v3129 = vadd.f32 %v3128, %v2839
        %v3130 = vadd.f32 %v3129, %v2840
        %v3131 = vadd.f32 %v3130, %v2841
        %v3132 = vadd.f32 %v3131, %v2842
        %v3133 = vadd.f32 %v3132, %v2843
        %v3134 = vadd.f32 %v3133, %v2844
        %v3135 = vadd.f32 %v3134, %v2845
        %v3136 = vadd.f32 %v3135, %v2846
        %v3137 = vadd.f32 %v3136, %v2847
        %v3138 = vadd.f32 %v3137, %v2848
        %v3139 = vadd.f32 %v3138, %v2849
        %v3140 = vrot.slane %v3139, 4
        %v3141 = vadd.f32 %v3139, %v3140
        %v3142 = vrot.slane %v3141, 2
        %v3143 = vadd.f32 %v3141, %v3142
        %v3144 = vrot.slane %v3143, 1
        %v3145 = vadd.f32 %v3143, %v3144
        %v3146 = vadd.f32 %v2850, %v2851
        %v3147 = vadd.f32 %v3146, %v2852
        %v3148 = vadd.f32 %v3147, %v2853
        %v3149 = vadd.f32 %v3148, %v2854
        %v3150 = vadd.f32 %v3149, %v2855
        %v3151 = vadd.f32 %v3150, %v2856
        %v3152 = vadd.f32 %v3151, %v2857
        %v3153 = vadd.f32 %v3152, %v2858
        %v3154 = vadd.f32 %v3153, %v2859
        %v3155 = vadd.f32 %v3154, %v2860
        %v3156 = vadd.f32 %v3155, %v2861
        %v3157 = vadd.f32 %v3156, %v2862
        %v3158 = vadd.f32 %v3157, %v2863
        %v3159 = vadd.f32 %v3158, %v2864
        %v3160 = vadd.f32 %v3159, %v2865
        %v3161 = vrot.slane %v3160, 4
        %v3162 = vadd.f32 %v3160, %v3161
        %v3163 = vrot.slane %v3162, 2
        %v3164 = vadd.f32 %v3162, %v3163
        %v3165 = vrot.slane %v3164, 1
        %v3166 = vadd.f32 %v3164, %v3165
        %v3167 = vadd.f32 %v2866, %v2867
        %v3168 = vadd.f32 %v3167, %v2868
        %v3169 = vadd.f32 %v3168, %v2869
        %v3170 = vadd.f32 %v3169, %v2870
        %v3171 = vadd.f32 %v3170, %v2871
        %v3172 = vadd.f32 %v3171, %v2872
        %v3173 = vadd.f32 %v3172, %v2873
        %v3174 = vadd.f32 %v3173, %v2874
        %v3175 = vadd.f32 %v3174, %v2875
        %v3176 = vadd.f32 %v3175, %v2876
        %v3177 = vadd.f32 %v3176, %v2877
        %v3178 = vadd.f32 %v3177, %v2878
        %v3179 = vadd.f32 %v3178, %v2879
        %v3180 = vadd.f32 %v3179, %v2880
        %v3181 = vadd.f32 %v3180, %v2881
        %v3182 = vrot.slane %v3181, 4
        %v3183 = vadd.f32 %v3181, %v3182
        %v3184 = vrot.slane %v3183, 2
        %v3185 = vadd.f32 %v3183, %v3184
        %v3186 = vrot.slane %v3185, 1
        %v3187 = vadd.f32 %v3185, %v3186
        %v3188 = vadd.f32 %v2882, %v2883
        %v3189 = vadd.f32 %v3188, %v2884
        %v3190 = vadd.f32 %v3189, %v2885
        %v3191 = vadd.f32 %v3190, %v2886
        %v3192 = vadd.f32 %v3191, %v2887
        %v3193 = vadd.f32 %v3192, %v2888
        %v3194 = vadd.f32 %v3193, %v2889
        %v3195 = vadd.f32 %v3194, %v2890
        %v3196 = vadd.f32 %v3195, %v2891
        %v3197 = vadd.f32 %v3196, %v2892
        %v3198 = vadd.f32 %v3197, %v2893
        %v3199 = vadd.f32 %v3198, %v2894
        %v3200 = vadd.f32 %v3199, %v2895
        %v3201 = vadd.f32 %v3200, %v2896
        %v3202 = vadd.f32 %v3201, %v2897
        %v3203 = vrot.slane %v3202, 4
        %v3204 = vadd.f32 %v3202, %v3203
        %v3205 = vrot.slane %v3204, 2
        %v3206 = vadd.f32 %v3204, %v3205
        %v3207 = vrot.slane %v3206, 1
        %v3208 = vadd.f32 %v3206, %v3207
        %v3209 = vadd.f32 %v2898, %v2899
        %v3210 = vadd.f32 %v3209, %v2900
        %v3211 = vadd.f32 %v3210, %v2901
        %v3212 = vadd.f32 %v3211, %v2902
        %v3213 = vadd.f32 %v3212, %v2903
        %v3214 = vadd.f32 %v3213, %v2904
        %v3215 = vadd.f32 %v3214, %v2905
        %v3216 = vadd.f32 %v3215, %v2906
        %v3217 = vadd.f32 %v3216, %v2907
        %v3218 = vadd.f32 %v3217, %v2908
        %v3219 = vadd.f32 %v3218, %v2909
        %v3220 = vadd.f32 %v3219, %v2910
        %v3221 = vadd.f32 %v3220, %v2911
        %v3222 = vadd.f32 %v3221, %v2912
        %v3223 = vadd.f32 %v3222, %v2913
        %v3224 = vrot.slane %v3223, 4
        %v3225 = vadd.f32 %v3223, %v3224
        %v3226 = vrot.slane %v3225, 2
        %v3227 = vadd.f32 %v3225, %v3226
        %v3228 = vrot.slane %v3227, 1
        %v3229 = vadd.f32 %v3227, %v3228
        %v3230 = vadd.f32 %v2914, %v2915
        %v3231 = vadd.f32 %v3230, %v2916
        %v3232 = vadd.f32 %v3231, %v2917
        %v3233 = vadd.f32 %v3232, %v2918
        %v3234 = vadd.f32 %v3233, %v2919
        %v3235 = vadd.f32 %v3234, %v2920
        %v3236 = vadd.f32 %v3235, %v2921
        %v3237 = vadd.f32 %v3236, %v2922
        %v3238 = vadd.f32 %v3237, %v2923
        %v3239 = vadd.f32 %v3238, %v2924
        %v3240 = vadd.f32 %v3239, %v2925
        %v3241 = vadd.f32 %v3240, %v2926
        %v3242 = vadd.f32 %v3241, %v2927
        %v3243 = vadd.f32 %v3242, %v2928
        %v3244 = vadd.f32 %v3243, %v2929
        %v3245 = vrot.slane %v3244, 4
        %v3246 = vadd.f32 %v3244, %v3245
        %v3247 = vrot.slane %v3246, 2
        %v3248 = vadd.f32 %v3246, %v3247
        %v3249 = vrot.slane %v3248, 1
        %v3250 = vadd.f32 %v3248, %v3249
        %v3251 = vadd.f32 %v2930, %v2931
        %v3252 = vadd.f32 %v3251, %v2932
        %v3253 = vadd.f32 %v3252, %v2933
        %v3254 = vadd.f32 %v3253, %v2934
        %v3255 = vadd.f32 %v3254, %v2935
        %v3256 = vadd.f32 %v3255, %v2936
        %v3257 = vadd.f32 %v3256, %v2937
        %v3258 = vadd.f32 %v3257, %v2938
        %v3259 = vadd.f32 %v3258, %v2939
        %v3260 = vadd.f32 %v3259, %v2940
        %v3261 = vadd.f32 %v3260, %v2941
        %v3262 = vadd.f32 %v3261, %v2942
        %v3263 = vadd.f32 %v3262, %v2943
        %v3264 = vadd.f32 %v3263, %v2944
        %v3265 = vadd.f32 %v3264, %v2945
        %v3266 = vrot.slane %v3265, 4
        %v3267 = vadd.f32 %v3265, %v3266
        %v3268 = vrot.slane %v3267, 2
        %v3269 = vadd.f32 %v3267, %v3268
        %v3270 = vrot.slane %v3269, 1
        %v3271 = vadd.f32 %v3269, %v3270
        %v3272 = vadd.f32 %v2946, %v2947
        %v3273 = vadd.f32 %v3272, %v2948
        %v3274 = vadd.f32 %v3273, %v2949
        %v3275 = vadd.f32 %v3274, %v2950
        %v3276 = vadd.f32 %v3275, %v2951
        %v3277 = vadd.f32 %v3276, %v2952
        %v3278 = vadd.f32 %v3277, %v2953
        %v3279 = vadd.f32 %v3278, %v2954
        %v3280 = vadd.f32 %v3279, %v2955
        %v3281 = vadd.f32 %v3280, %v2956
        %v3282 = vadd.f32 %v3281, %v2957
        %v3283 = vadd.f32 %v3282, %v2958
        %v3284 = vadd.f32 %v3283, %v2959
        %v3285 = vadd.f32 %v3284, %v2960
        %v3286 = vadd.f32 %v3285, %v2961
        %v3287 = vrot.slane %v3286, 4
        %v3288 = vadd.f32 %v3286, %v3287
        %v3289 = vrot.slane %v3288, 2
        %v3290 = vadd.f32 %v3288, %v3289
        %v3291 = vrot.slane %v3290, 1
        %v3292 = vadd.f32 %v3290, %v3291
        %v3293 = vadd.f32 %v2962, %v2963
        %v3294 = vadd.f32 %v3293, %v2964
        %v3295 = vadd.f32 %v3294, %v2965
        %v3296 = vadd.f32 %v3295, %v2966
        %v3297 = vadd.f32 %v3296, %v2967
        %v3298 = vadd.f32 %v3297, %v2968
        %v3299 = vadd.f32 %v3298, %v2969
        %v3300 = vadd.f32 %v3299, %v2970
        %v3301 = vadd.f32 %v3300, %v2971
        %v3302 = vadd.f32 %v3301, %v2972
        %v3303 = vadd.f32 %v3302, %v2973
        %v3304 = vadd.f32 %v3303, %v2974
        %v3305 = vadd.f32 %v3304, %v2975
        %v3306 = vadd.f32 %v3305, %v2976
        %v3307 = vadd.f32 %v3306, %v2977
        %v3308 = vrot.slane %v3307, 4
        %v3309 = vadd.f32 %v3307, %v3308
        %v3310 = vrot.slane %v3309, 2
        %v3311 = vadd.f32 %v3309, %v3310
        %v3312 = vrot.slane %v3311, 1
        %v3313 = vadd.f32 %v3311, %v3312
        %v3314 = vpack.c.bf16 %v2998, %v2998
        %v3315 = vpack.c.bf16 %v3019, %v3019
        %v3316 = vpack.c.bf16 %v3040, %v3040
        %v3317 = vpack.c.bf16 %v3061, %v3061
        %v3318 = vpack.c.bf16 %v3082, %v3082
        %v3319 = vpack.c.bf16 %v3103, %v3103
        %v3320 = vpack.c.bf16 %v3124, %v3124
        %v3321 = vpack.c.bf16 %v3145, %v3145
        %v3322 = vpack.c.bf16 %v3166, %v3166
        %v3323 = vpack.c.bf16 %v3187, %v3187
        %v3324 = vpack.c.bf16 %v3208, %v3208
        %v3325 = vpack.c.bf16 %v3229, %v3229
        %v3326 = vpack.c.bf16 %v3250, %v3250
        %v3327 = vpack.c.bf16 %v3271, %v3271
        %v3328 = vpack.c.bf16 %v3292, %v3292
        %v3329 = vpack.c.bf16 %v3313, %v3313
        %v3330 = vld [vmem:[#allocation7] sm:$0xf]
        %v3331 = vld [vmem:[#allocation7 + $0x4] sm:$0xf]
        %v3332 = vld [vmem:[#allocation7 + $0x8] sm:$0xf]
        %v3333 = vld [vmem:[#allocation7 + $0xc] sm:$0xf]
        %v3334 = vld [vmem:[#allocation7 + $0x10] sm:$0xf]
        %v3335 = vld [vmem:[#allocation7 + $0x14] sm:$0xf]
        %v3336 = vld [vmem:[#allocation7 + $0x18] sm:$0xf]
        %v3337 = vld [vmem:[#allocation7 + $0x1c] sm:$0xf]
        %v3338 = vld [vmem:[#allocation7 + $0x20] sm:$0xf]
        %v3339 = vld [vmem:[#allocation7 + $0x24] sm:$0xf]
        %v3340 = vld [vmem:[#allocation7 + $0x28] sm:$0xf]
        %v3341 = vld [vmem:[#allocation7 + $0x2c] sm:$0xf]
        %v3342 = vld [vmem:[#allocation7 + $0x30] sm:$0xf]
        %v3343 = vld [vmem:[#allocation7 + $0x34] sm:$0xf]
        %v3344 = vld [vmem:[#allocation7 + $0x38] sm:$0xf]
        %v3345 = vld [vmem:[#allocation7 + $0x3c] sm:$0xf]
        %v3362 = vunpack.c.l.b16 %v3314
        %v3363 = vunpack.c.l.b16 %v3315
        %v3364 = vunpack.c.l.b16 %v3316
        %v3365 = vunpack.c.l.b16 %v3317
        %v3366 = vunpack.c.l.b16 %v3318
        %v3367 = vunpack.c.l.b16 %v3319
        %v3368 = vunpack.c.l.b16 %v3320
        %v3369 = vunpack.c.l.b16 %v3321
        %v3370 = vunpack.c.l.b16 %v3322
        %v3371 = vunpack.c.l.b16 %v3323
        %v3372 = vunpack.c.l.b16 %v3324
        %v3373 = vunpack.c.l.b16 %v3325
        %v3374 = vunpack.c.l.b16 %v3326
        %v3375 = vunpack.c.l.b16 %v3327
        %v3376 = vunpack.c.l.b16 %v3328
        %v3377 = vunpack.c.l.b16 %v3329
        %vm3378 = vcmask 1041409
        %v3379 = vsel %vm3378, %v3363, %v3362
        %vm3380 = vcmask 1042434
        %v3381 = vsel %vm3380, %v3364, %v3379
        %vm3382 = vcmask 1043459
        %v3383 = vsel %vm3382, %v3365, %v3381
        %vm3384 = vcmask 1044484
        %v3385 = vsel %vm3384, %v3366, %v3383
        %vm3386 = vcmask 1045509
        %v3387 = vsel %vm3386, %v3367, %v3385
        %vm3388 = vcmask 1046534
        %v3389 = vsel %vm3388, %v3368, %v3387
        %vm3390 = vcmask 1047559
        %v3391 = vsel %vm3390, %v3369, %v3389
        %v3392 = vsel %vm3378, %v3371, %v3370
        %v3393 = vsel %vm3380, %v3372, %v3392
        %v3394 = vsel %vm3382, %v3373, %v3393
        %v3395 = vsel %vm3384, %v3374, %v3394
        %v3396 = vsel %vm3386, %v3375, %v3395
        %v3397 = vsel %vm3388, %v3376, %v3396
        %v3398 = vsel %vm3390, %v3377, %v3397
        %v3399 = vpack.c.b16 %v3398, %v3391
        %v3417 = vunpack.c.l.b16 %v3330
        %v3418 = vunpack.c.l.b16 %v3331
        %v3419 = vunpack.c.l.b16 %v3332
        %v3420 = vunpack.c.l.b16 %v3333
        %v3421 = vunpack.c.l.b16 %v3334
        %v3422 = vunpack.c.l.b16 %v3335
        %v3423 = vunpack.c.l.b16 %v3336
        %v3424 = vunpack.c.l.b16 %v3337
        %v3425 = vunpack.c.l.b16 %v3338
        %v3426 = vunpack.c.l.b16 %v3339
        %v3427 = vunpack.c.l.b16 %v3340
        %v3428 = vunpack.c.l.b16 %v3341
        %v3429 = vunpack.c.l.b16 %v3342
        %v3430 = vunpack.c.l.b16 %v3343
        %v3431 = vunpack.c.l.b16 %v3344
        %v3432 = vunpack.c.l.b16 %v3345
        %v3433 = vpack.c.b16 %v3418, %v3417
        %v3434 = vpack.c.b16 %v3420, %v3419
        %v3435 = vpack.c.b16 %v3422, %v3421
        %v3436 = vpack.c.b16 %v3424, %v3423
        %v3437 = vpack.c.b16 %v3426, %v3425
        %v3438 = vpack.c.b16 %v3428, %v3427
        %v3439 = vpack.c.b16 %v3430, %v3429
        %v3440 = vpack.c.b16 %v3432, %v3431
        %3449 = vmatprep.subr.bf16.mxu0 0
        %3450 = vmatpush1.bf16.msra.mxu0 %v3440
        %3451 = vmatprep.subr.bf16.mxu0 0
        %3452 = vmatpush1.bf16.msra.mxu0 %v3439
        %3453 = vmatprep.subr.bf16.mxu0 0
        %3454 = vmatpush1.bf16.msra.mxu0 %v3438
        %3455 = vmatprep.subr.bf16.mxu0 0
        %3456 = vmatpush1.bf16.msra.mxu0 %v3437
        %3457 = vmatprep.subr.bf16.mxu0 0
        %3458 = vmatpush1.bf16.msra.mxu0 %v3436
        %3459 = vmatprep.subr.bf16.mxu0 0
        %3460 = vmatpush1.bf16.msra.mxu0 %v3435
        %3461 = vmatprep.subr.bf16.mxu0 0
        %3462 = vmatpush1.bf16.msra.mxu0 %v3434
        %3463 = vmatprep.subr.bf16.mxu0 0
        %3464 = vmatpush1.bf16.msra.mxu0 %v3433
        %3465 = vmatprep.subr.bf16.mxu0 0
        %3466 = vmatpush2.bf16.msra.mxu0 0
        %3467 = vmatprep.subr.bf16.mxu0 0
        %3468 = vmatpush2.bf16.msra.mxu0 0
        %3469 = vmatprep.subr.bf16.mxu0 0
        %3470 = vmatpush2.bf16.msra.mxu0 0
        %3471 = vmatprep.subr.bf16.mxu0 0
        %3472 = vmatpush2.bf16.msra.mxu0 0
        %3473 = vmatprep.subr.bf16.mxu0 0
        %3474 = vmatpush2.bf16.msra.mxu0 0
        %3475 = vmatprep.subr.bf16.mxu0 0
        %3476 = vmatpush2.bf16.msra.mxu0 0
        %3477 = vmatprep.subr.bf16.mxu0 0
        %3478 = vmatpush2.bf16.msra.mxu0 0
        %3479 = vmatprep.subr.bf16.mxu0 0
        %3480 = vmatpush2.bf16.msra.mxu0 0
        %3481 = vmatprep.mubr.bf16.mxu0 0
        %3482 = vmatmul.mubr.bf16.gmra.mxu0 %v3399
        %v3483 = vpop.f32.mrf.mxu0
        %v3484 = vadd.f32 0.0, %v3483
        %v3485 = vpop.f32.mrf.mxu0
        %v3486 = vpop.f32.mrf.mxu0
        %v3487 = vadd.f32 0.0, %v3486
        %v3488 = vpop.f32.mrf.mxu0
        %3489 = vdwg.mxu0
        %3490 = vadd.xlane.f32.xlu0 %v318
        %v3491 = vpop.xlane.xlu0 %3490
        %3492 = vadd.xlane.f32.xlu0 %v319
        %v3493 = vpop.xlane.xlu0 %3492
        %v3494 = vmax.f32 %v3491, 1e-09
        %v3495 = vmax.f32 %v3493, 1e-09
        %v3496 = vrcp.pop %v3494
        %v3497 = vmul.f32 %v3484, %v3496
        %v3498 = vrcp.pop %v3495
        %v3499 = vmul.f32 %v3487, %v3498
        %vm3500 = vcmp.gt.f32.partialorder %v3491, 0.0
        %vm3501 = vcmp.gt.f32.partialorder %v3493, 0.0
        %v3502 = vsel %vm3500, 1.0, 0.0
        %v3503 = vsel %vm3501, 1.0, 0.0
        %v3504 = vld [vmem:[#allocation8] sm:$0xff]
        %v3505 = vld [vmem:[#allocation8 + $0x8] sm:$0xff]
        %v3506 = vld [vmem:[#allocation8 + $0x10] sm:$0xff]
        %v3507 = vld [vmem:[#allocation8 + $0x18] sm:$0xff]
        %v3508 = vld [vmem:[#allocation8 + $0x20] sm:$0xff]
        %v3509 = vld [vmem:[#allocation8 + $0x28] sm:$0xff]
        %v3510 = vld [vmem:[#allocation8 + $0x30] sm:$0xff]
        %v3511 = vld [vmem:[#allocation8 + $0x38] sm:$0xff]
        %v3512 = vld [vmem:[#allocation8 + $0x40] sm:$0xff]
        %v3513 = vld [vmem:[#allocation8 + $0x48] sm:$0xff]
        %v3514 = vld [vmem:[#allocation8 + $0x50] sm:$0xff]
        %v3515 = vld [vmem:[#allocation8 + $0x58] sm:$0xff]
        %v3516 = vld [vmem:[#allocation8 + $0x60] sm:$0xff]
        %v3517 = vld [vmem:[#allocation8 + $0x68] sm:$0xff]
        %v3518 = vld [vmem:[#allocation8 + $0x70] sm:$0xff]
        %v3519 = vld [vmem:[#allocation8 + $0x78] sm:$0xff]
        %v3520 = vld [vmem:[%s4] sm:$0x1]
        %v3522 = vlaneseq
        %v3523 = vshrl.u32 %v3522, 7
        %v3524 = vsub.s32 0, %v3523
        %v3525 = vrot.slane %v3520, %v3524
        %v3527 = vmul.f32 %v3525, %v3502
        %v3528 = vmul.f32 %v3525, %v3503
        %3529 = vmatprep.subr.mxu0 0.0
        %3530 = vmatpush1.msra.mxu0 %v3519
        %3531 = vmatprep.subr.mxu0 0.0
        %3532 = vmatpush1.msra.mxu0 %v3518
        %3533 = vmatprep.subr.mxu0 0.0
        %3534 = vmatpush1.msra.mxu0 %v3517
        %3535 = vmatprep.subr.mxu0 0.0
        %3536 = vmatpush1.msra.mxu0 %v3516
        %3537 = vmatprep.subr.mxu0 0.0
        %3538 = vmatpush1.msra.mxu0 %v3515
        %3539 = vmatprep.subr.mxu0 0.0
        %3540 = vmatpush1.msra.mxu0 %v3514
        %3541 = vmatprep.subr.mxu0 0.0
        %3542 = vmatpush1.msra.mxu0 %v3513
        %3543 = vmatprep.subr.mxu0 0.0
        %3544 = vmatpush1.msra.mxu0 %v3512
        %3545 = vmatprep.subr.mxu0 0.0
        %3546 = vmatpush1.msra.mxu0 %v3511
        %3547 = vmatprep.subr.mxu0 0.0
        %3548 = vmatpush1.msra.mxu0 %v3510
        %3549 = vmatprep.subr.mxu0 0.0
        %3550 = vmatpush1.msra.mxu0 %v3509
        %3551 = vmatprep.subr.mxu0 0.0
        %3552 = vmatpush1.msra.mxu0 %v3508
        %3553 = vmatprep.subr.mxu0 0.0
        %3554 = vmatpush1.msra.mxu0 %v3507
        %3555 = vmatprep.subr.mxu0 0.0
        %3556 = vmatpush1.msra.mxu0 %v3506
        %3557 = vmatprep.subr.mxu0 0.0
        %3558 = vmatpush1.msra.mxu0 %v3505
        %3559 = vmatprep.subr.mxu0 0.0
        %3560 = vmatpush1.msra.mxu0 %v3504
        %3561 = vmatprep.subr.mxu0 0.0
        %3562 = vmatpush2.msra.mxu0 0.0
        %3563 = vmatprep.subr.mxu0 0.0
        %3564 = vmatpush2.msra.mxu0 0.0
        %3565 = vmatprep.subr.mxu0 0.0
        %3566 = vmatpush2.msra.mxu0 0.0
        %3567 = vmatprep.subr.mxu0 0.0
        %3568 = vmatpush2.msra.mxu0 0.0
        %3569 = vmatprep.subr.mxu0 0.0
        %3570 = vmatpush2.msra.mxu0 0.0
        %3571 = vmatprep.subr.mxu0 0.0
        %3572 = vmatpush2.msra.mxu0 0.0
        %3573 = vmatprep.subr.mxu0 0.0
        %3574 = vmatpush2.msra.mxu0 0.0
        %3575 = vmatprep.subr.mxu0 0.0
        %3576 = vmatpush2.msra.mxu0 0.0
        %3577 = vmatprep.subr.mxu0 0.0
        %3578 = vmatpush2.msra.mxu0 0.0
        %3579 = vmatprep.subr.mxu0 0.0
        %3580 = vmatpush2.msra.mxu0 0.0
        %3581 = vmatprep.subr.mxu0 0.0
        %3582 = vmatpush2.msra.mxu0 0.0
        %3583 = vmatprep.subr.mxu0 0.0
        %3584 = vmatpush2.msra.mxu0 0.0
        %3585 = vmatprep.subr.mxu0 0.0
        %3586 = vmatpush2.msra.mxu0 0.0
        %3587 = vmatprep.subr.mxu0 0.0
        %3588 = vmatpush2.msra.mxu0 0.0
        %3589 = vmatprep.subr.mxu0 0.0
        %3590 = vmatpush2.msra.mxu0 0.0
        %3591 = vmatprep.subr.mxu0 0.0
        %3592 = vmatpush2.msra.mxu0 0.0
        %3593 = vmatprep.mubr.f32.mxu0 0.0
        %3594 = vmatmul.mubr.f32.gmra.mxu0 %v3497
        %v3595 = vpop.f32.mrf.mxu0
        %v3596 = vadd.f32 %v3527, %v3595
        %v3597 = vpop.f32.mrf.mxu0
        %3598 = vmatprep.mubr.f32.mxu0 0.0
        %3599 = vmatmul.mubr.f32.gmra.mxu0 %v3499
        %v3600 = vpop.f32.mrf.mxu0
        %v3601 = vadd.f32 %v3528, %v3600
        %v3602 = vpop.f32.mrf.mxu0
        %3603 = vdwg.mxu0
        %3604 = vst [vmem:[%s311] sm:$0xff] %v3596
        %3605 = vst [vmem:[%s311 + $0x8] sm:$0xff] %v3601
        %s3606 = sand.u32 %s149, 1
        %s3607 = scalar_lea.sflag [#allocation4], %s3606
        %s3608 = sand.u32 %s149, 1
        %s3609 = smul.addr %s3608, 16
        %s3610 = scalar_lea.vmem [#allocation10], %s3609
        // Predicated region
        $region57: #{tpu_custom_call.1} parent=39 // pred_check
          %p3611 = pneg %p159
        $region58: #{tpu_custom_call.1} parent=39 // pred_check_branch
          %3613 = sbr.rel (%p3611) target = $region60
        $region59: #{tpu_custom_call.1} parent=39 // pred_region
          %s3614 = smul.u32 2, %s26
          %s3616 = ssub.s32 256, 256
          %3617 = vsyncadd %s3607, %s3616
          %s3618 = smul.addr %s3614, 128
          %s3619 = scalar_lea.hbm %s5, %s3618
          %s3620 = sshll.u32 %s3610, 4
          %s3621 = int_to_ptr.vmem [resolvable:$true] %s3620
          %3626 = dma.vmem_to_hbm [thread:$0]  %s3621, 256, %s3619, %s3607, 128, 128, 8
        $region60: #{tpu_custom_call.1} parent=39 // pred_fallthru
          _
      $region40: #{tpu_custom_call.1} parent=5 // pred_fallthru
        _
      %p3627 = scmp.le.s32.totalorder 2, %s21
      // Predicated region
      $region61: #{tpu_custom_call.1} parent=5 // pred_check
        %p3628 = pneg %p3627
      $region62: #{tpu_custom_call.1} parent=5 // pred_check_branch
        %3630 = sbr.rel (%p3628) target = $region64
      $region63: #{tpu_custom_call.1} parent=5 // pred_region
        %s3631 = ssub.s32 %s21, 2
        // Predicated region
        $region65: #{tpu_custom_call.1} parent=63 // pred_check
          %p3632 = pneg %p165
        $region66: #{tpu_custom_call.1} parent=63 // pred_check_branch
          %3634 = sbr.rel (%p3632) target = $region68
        $region67: #{tpu_custom_call.1} parent=63 // pred_region
          %s3635 = sand.u32 %s150, 1
          %s3636 = scalar_lea.sflag [#allocation4], %s3635
          %s3637 = sand.u32 %s150, 1
          %s3638 = smul.addr %s3637, 16
          %s3639 = scalar_lea.vmem [#allocation10], %s3638
          %3640 = dma.done %s3636, 256
        $region68: #{tpu_custom_call.1} parent=63 // pred_fallthru
          _
      $region64: #{tpu_custom_call.1} parent=5 // pred_fallthru
        _
    $region6: #{tpu_custom_call.1} parent=1 // loop_footer
      %s25 = sadd.s32 1, %s21
    $region7: #{tpu_custom_call.1} parent=1 // loop_footer_branch
      %20 = sbr.rel target = $region3
    $region8: #{tpu_custom_call.1} parent=1 // loop_exit
      _
    %3641 = vsyncpa [#allocation3], 1
    %s3642 = scalar_lea.sflag [#allocation3], 1
    %3643 = vsyncpa %s3642, 1
    %3644 = vsyncpa [#allocation6], 1
    %s3645 = scalar_lea.sflag [#allocation6], 1
    %3646 = vsyncpa %s3645, 1
    %3647 = vsyncpa [#allocation9], 1
    %3648 = vsyncpa [#allocation4], 1
    %s3649 = scalar_lea.sflag [#allocation4], 1
    %3650 = vsyncpa %s3649, 1

</llo_original>
